<compile_context>
chip_gen: v7x
topology: tpu7x:2x2x1
jax: 0.10.0
libtpu: 0.0.40
codegen_flags: <defaults>
</compile_context>

<pallas_src>
import jax
import jax.numpy as jnp
from jax import lax
from jax.experimental import pallas as pl
from jax.experimental.pallas import tpu as pltpu


# --------------------------------------------------------------------------- #
# Pallas kernel
# --------------------------------------------------------------------------- #
def lstm_chunk_kernel(emb_ref, wih_ref, whh_ref, bias_ref,
                      out_ref, hn_ref, cn_ref, gx_ref):
    """One chunk of the LSTM recurrence.

    emb_ref : (t_chunk*B_pad, E)   time-major embedding rows (row = t*B_pad + b)
    wih_ref : (E, 4H)              input weight, transposed, gate order [i,f,o,g]
    whh_ref : (H, 4H)              recurrent weight, transposed, [i,f,o,g]
    bias_ref: (1, 4H)  f32         b_ih + b_hh, [i,f,o,g]
    out_ref : (t_chunk*B_pad, H)   per-step hidden states (time-major rows)
    hn_ref  : (B_pad, H) f32       VMEM-resident h carry across chunks == final h
    cn_ref  : (B_pad, H) f32       VMEM-resident c carry across chunks == final c
    gx_ref  : (t_chunk*B_pad, 4H)  f32 VMEM scratch for the fused input projection
    """
    b_pad, H = hn_ref.shape
    rows = emb_ref.shape[0]
    t_chunk = rows // b_pad

    @pl.when(pl.program_id(0) == 0)
    def _():
        hn_ref[...] = jnp.zeros_like(hn_ref)
        cn_ref[...] = jnp.zeros_like(cn_ref)

    # ---- Fused input projection for the whole chunk: one big MXU matmul
    # (no serial dependence), f32 accumulation into VMEM scratch.
    gx_ref[...] = (
        jnp.dot(emb_ref[...], wih_ref[...], preferred_element_type=jnp.float32)
        + bias_ref[...])

    whh = whh_ref[...]                      # (H, 4H); stays resident for the chunk
    cdt = whh.dtype                         # MXU compute dtype (bf16 or f32)

    def step(t, carry):
        h, c = carry                                            # (B_pad, H) f32
        row0 = pl.multiple_of(t * b_pad, b_pad)                 # 8-aligned offset
        gates = gx_ref[pl.ds(row0, b_pad), :] + jnp.dot(
            h.astype(cdt), whh, preferred_element_type=jnp.float32)  # (B_pad, 4H)
        # Gates are pre-permuted to [i, f, o, g]: one sigmoid over 3H lanes,
        # one tanh over H lanes (2 EUP dispatches on the serial chain).
        sig = jax.nn.sigmoid(gates[:, :3 * H])
        i_g = sig[:, 0 * H:1 * H]
        f_g = sig[:, 1 * H:2 * H]
        o_g = sig[:, 2 * H:3 * H]
        g_g = jnp.tanh(gates[:, 3 * H:])
        c_new = f_g * c + i_g * g_g
        h_new = o_g * jnp.tanh(c_new)
        out_ref[pl.ds(row0, b_pad), :] = h_new                  # tile-aligned store
        return h_new, c_new

    h, c = lax.fori_loop(0, t_chunk, step, (hn_ref[...], cn_ref[...]),
                         unroll=min(8, t_chunk))

    # Single carry / final-state write per chunk (last chunk == final states).
    hn_ref[...] = h
    cn_ref[...] = c


# --------------------------------------------------------------------------- #
# Wrapper: pallas_call plumbing
# --------------------------------------------------------------------------- #
def _pick_chunk(seq_len, b_pad, hidden, embed, elem_bytes,
                max_chunk=512, vmem_budget=8 * 1024 * 1024):
    """Largest timestep chunk whose streamed buffers fit a VMEM budget."""
    per_row = (4 * hidden * 4            # gx scratch (f32)
               + 2 * hidden * 4          # double-buffered output block (f32)
               + 2 * embed * elem_bytes)  # double-buffered emb block
    t_max = max(1, min(max_chunk, vmem_budget // (per_row * b_pad)))
    if seq_len <= t_max:
        return seq_len
    for cand in range(t_max, 0, -1):
        if seq_len % cand == 0:
            return cand
    return seq_len


def lstm_pallas(emb2d, wih_t, whh_t, bias2d, *, b_pad, t_chunk=None):
    """emb2d: (T*B_pad, E) time-major embedding rows (row = t*B_pad + b).
    wih_t: (E, 4H), whh_t: (H, 4H) (gate order [i,f,o,g]), bias2d: (1, 4H) f32.
    Returns (out2d (T*B_pad, H) f32, h_n (B_pad, H) f32, c_n (B_pad, H) f32)."""
    rows_total, E = emb2d.shape
    H, G = whh_t.shape
    assert G == 4 * H and bias2d.shape == (1, G)
    assert rows_total % b_pad == 0 and b_pad % 8 == 0
    T = rows_total // b_pad

    if t_chunk is None:
        t_chunk = _pick_chunk(T, b_pad, H, E, jnp.dtype(emb2d.dtype).itemsize)
    assert T % t_chunk == 0
    num_chunks = T // t_chunk
    rows = t_chunk * b_pad

    grid_spec = pltpu.PrefetchScalarGridSpec(
        num_scalar_prefetch=0,
        grid=(num_chunks,),
        in_specs=[
            pl.BlockSpec((rows, E), lambda c: (c, 0)),     # streamed emb chunk
            pl.BlockSpec((E, G), lambda c: (0, 0)),        # W_ih^T (constant block)
            pl.BlockSpec((H, G), lambda c: (0, 0)),        # W_hh^T (constant block)
            pl.BlockSpec((1, G), lambda c: (0, 0)),        # bias    (constant block)
        ],
        out_specs=[
            pl.BlockSpec((rows, H), lambda c: (c, 0)),     # per-step hidden states
            pl.BlockSpec((b_pad, H), lambda c: (0, 0)),    # resident h carry
            pl.BlockSpec((b_pad, H), lambda c: (0, 0)),    # resident c carry
        ],
        scratch_shapes=[pltpu.VMEM((rows, G), jnp.float32)],  # fused gx chunk
    )

    return pl.pallas_call(
        lstm_chunk_kernel,
        out_shape=(
            jax.ShapeDtypeStruct((rows_total, H), jnp.float32),
            jax.ShapeDtypeStruct((b_pad, H), jnp.float32),
            jax.ShapeDtypeStruct((b_pad, H), jnp.float32),
        ),
        grid_spec=grid_spec,
        compiler_params=pltpu.CompilerParams(
            # The time recurrence is inherently sequential.
            dimension_semantics=("arbitrary",)),
    )(emb2d, wih_t, whh_t, bias2d)


# --------------------------------------------------------------------------- #
# Parameters + forward (module semantics)
# --------------------------------------------------------------------------- #
def init_params(key, input_dim, embed_dim, hidden_dim):
    k_emb, k_wih, k_whh, k_bih, k_bhh = jax.random.split(key, 5)
    bound = 1.0 / jnp.sqrt(hidden_dim)
    return {
        # nn.Embedding default init: N(0, 1)
        "embedding": jax.random.normal(k_emb, (input_dim, embed_dim), jnp.float32),
        # nn.LSTM default init: U(-1/sqrt(H), 1/sqrt(H)), gate rows [i, f, g, o]
        "w_ih": jax.random.uniform(k_wih, (4 * hidden_dim, embed_dim),
                                   jnp.float32, -bound, bound),
        "w_hh": jax.random.uniform(k_whh, (4 * hidden_dim, hidden_dim),
                                   jnp.float32, -bound, bound),
        "b_ih": jax.random.uniform(k_bih, (4 * hidden_dim,),
                                   jnp.float32, -bound, bound),
        "b_hh": jax.random.uniform(k_bhh, (4 * hidden_dim,),
                                   jnp.float32, -bound, bound),
    }


def _permute_ifog(w):
    """Reorder PyTorch gate rows [i, f, g, o] -> [i, f, o, g] (along axis 0)."""
    h = w.shape[0] // 4
    return jnp.concatenate([w[:2 * h], w[3 * h:], w[2 * h:3 * h]], axis=0)


def encoder_forward(params, src, compute_dtype=jnp.bfloat16):
    """src: (B, T) int32 token ids.
    Returns (outputs (B,T,H) f32, hidden (1,B,H), cell (1,B,H)) like the module.
    compute_dtype: dtype of the MXU operands (accumulation/elementwise stay f32)."""
    B, T = src.shape
    H = params["w_hh"].shape[1]
    b_pad = ((B + 7) // 8) * 8                       # pad batch to a sublane group

    # Gate-row permutation so the kernel does one sigmoid(3H) + one tanh(H).
    w_ih = _permute_ifog(params["w_ih"])             # (4H, E)
    w_hh = _permute_ifog(params["w_hh"])             # (4H, H)
    bias = _permute_ifog(params["b_ih"] + params["b_hh"])  # (4H,)

    # Time-major embedding gather (XLA glue), pad batch, flatten to rows.
    emb = params["embedding"][src.T]                 # (T, B, E)
    if b_pad != B:
        emb = jnp.pad(emb, ((0, 0), (0, b_pad - B), (0, 0)))
    E = emb.shape[-1]
    emb2d = emb.reshape(T * b_pad, E).astype(compute_dtype)

    out2d, h_n, c_n = lstm_pallas(
        emb2d,
        w_ih.T.astype(compute_dtype),                # (E, 4H)
        w_hh.T.astype(compute_dtype),                # (H, 4H)
        bias.reshape(1, -1).astype(jnp.float32),     # (1, 4H)
        b_pad=b_pad)

    outputs = out2d.reshape(T, b_pad, H)[:, :B].transpose(1, 0, 2)  # (B, T, H)
    return outputs, h_n[:B][None], c_n[:B][None]     # num_layers = 1


def encoder_forward_ref(params, src):
    """Pure-JAX f32 reference (lax.scan), PyTorch gate order, for correctness."""
    emb = params["embedding"][src].astype(jnp.float32)      # (B, T, E)
    B, T, E = emb.shape
    H = params["w_hh"].shape[1]
    w_ih_t = params["w_ih"].T
    w_hh_t = params["w_hh"].T
    bias = params["b_ih"] + params["b_hh"]
    hi = lax.Precision.HIGHEST

    def step(carry, x_t):
        h, c = carry
        gates = (jnp.dot(x_t, w_ih_t, precision=hi)
                 + jnp.dot(h, w_hh_t, precision=hi) + bias)
        i = jax.nn.sigmoid(gates[:, 0 * H:1 * H])
        f = jax.nn.sigmoid(gates[:, 1 * H:2 * H])
        g = jnp.tanh(gates[:, 2 * H:3 * H])
        o = jax.nn.sigmoid(gates[:, 3 * H:4 * H])
        c_new = f * c + i * g
        h_new = o * jnp.tanh(c_new)
        return (h_new, c_new), h_new

    h0 = jnp.zeros((B, H), jnp.float32)
    c0 = jnp.zeros((B, H), jnp.float32)
    (h_n, c_n), out_tbh = lax.scan(step, (h0, c0), jnp.transpose(emb, (1, 0, 2)))
    return jnp.transpose(out_tbh, (1, 0, 2)), h_n[None], c_n[None]


if __name__ == "__main__":
    INPUT_DIM = 50     # vocab size
    EMBED_DIM = 32
    HIDDEN_DIM = 32
    BATCH = 2
    SRC_LEN = 8

    key = jax.random.PRNGKey(0)
    k_params, k_src = jax.random.split(key)
    params = init_params(k_params, INPUT_DIM, EMBED_DIM, HIDDEN_DIM)
    src = jax.random.randint(k_src, (BATCH, SRC_LEN), 0, INPUT_DIM, jnp.int32)

    ref_out, ref_h, ref_c = encoder_forward_ref(params, src)

    # f32 MXU-operand path: near-exact vs the f32 reference.
    out32, h32, c32 = encoder_forward(params, src, compute_dtype=jnp.float32)
    jax.block_until_ready((out32, h32, c32))
    assert out32.shape == (BATCH, SRC_LEN, HIDDEN_DIM)
    assert h32.shape == (1, BATCH, HIDDEN_DIM)
    assert c32.shape == (1, BATCH, HIDDEN_DIM)
    assert jnp.allclose(out32, ref_out, atol=1e-4)
    assert jnp.allclose(h32, ref_h, atol=1e-4)
    assert jnp.allclose(c32, ref_c, atol=1e-4)

    # bf16 MXU-operand path (default; f32 accumulation + f32 elementwise):
    # expected bf16 input-rounding only, so a looser tolerance.
    outbf, hbf, cbf = encoder_forward(params, src)
    jax.block_until_ready((outbf, hbf, cbf))
    assert jnp.allclose(outbf, ref_out, atol=5e-2)
    assert jnp.allclose(hbf, ref_h, atol=5e-2)
    assert jnp.allclose(cbf, ref_c, atol=5e-2)

    print("KERNEL_OK")
</pallas_src>

<mosaic_0001>
module attributes {stable_mosaic.version = 11 : i64} {
  func.func @lstm_chunk_kernel(%arg0: i32, %arg1: memref<64x32xf32, #tpu.memory_space<vmem>>, %arg2: memref<32x128xf32, #tpu.memory_space<vmem>>, %arg3: memref<32x128xf32, #tpu.memory_space<vmem>>, %arg4: memref<1x128xf32, #tpu.memory_space<vmem>>, %arg5: memref<64x32xf32, #tpu.memory_space<vmem>>, %arg6: memref<8x32xf32, #tpu.memory_space<vmem>>, %arg7: memref<8x32xf32, #tpu.memory_space<vmem>>, %arg8: memref<64x128xf32, #tpu.memory_space<vmem>>) attributes {dimension_semantics = [#tpu.dimension_semantics<arbitrary>], iteration_bounds = array<i64: 1>, scalar_prefetch = 0 : i64, scratch_operands = 1 : i64, tpu.core_type = #tpu.core_type<tc>, window_params = [{transform_indices = @transform_0, window_bounds = array<i64: 64, 32>}, {pipeline_mode = #tpu.pipeline_mode<synchronous>, transform_indices = @transform_1, window_bounds = array<i64: 32, 128>}, {pipeline_mode = #tpu.pipeline_mode<synchronous>, transform_indices = @transform_2, window_bounds = array<i64: 32, 128>}, {pipeline_mode = #tpu.pipeline_mode<synchronous>, transform_indices = @transform_3, window_bounds = array<i64: 1, 128>}, {transform_indices = @transform_4, window_bounds = array<i64: 64, 32>}, {pipeline_mode = #tpu.pipeline_mode<synchronous>, transform_indices = @transform_5, window_bounds = array<i64: 8, 32>}, {pipeline_mode = #tpu.pipeline_mode<synchronous>, transform_indices = @transform_6, window_bounds = array<i64: 8, 32>}]} {
    %c0_i32 = arith.constant 0 : i32
    %0 = arith.cmpi eq, %arg0, %c0_i32 : i32
    %1 = arith.extui %0 : i1 to i32
    %c0_i32_0 = arith.constant 0 : i32
    %2 = arith.cmpi ne, %1, %c0_i32_0 : i32
    scf.if %2 {
      %cst_59 = arith.constant 0.000000e+00 : f32
      %207 = vector.broadcast %cst_59 : f32 to vector<8x32xf32>
      %c0_60 = arith.constant 0 : index
      %c0_61 = arith.constant 0 : index
      %208 = vector.load %arg6[%c0_60, %c0_61] : memref<8x32xf32, #tpu.memory_space<vmem>>, vector<8x32xf32>
      tpu.vector_store %arg6[%c0_60, %c0_61], %207 {strides = array<i32>} : memref<8x32xf32, #tpu.memory_space<vmem>>, vector<8x32xf32>,
      %cst_62 = arith.constant 0.000000e+00 : f32
      %209 = vector.broadcast %cst_62 : f32 to vector<8x32xf32>
      %c0_63 = arith.constant 0 : index
      %c0_64 = arith.constant 0 : index
      %210 = vector.load %arg7[%c0_63, %c0_64] : memref<8x32xf32, #tpu.memory_space<vmem>>, vector<8x32xf32>
      tpu.vector_store %arg7[%c0_63, %c0_64], %209 {strides = array<i32>} : memref<8x32xf32, #tpu.memory_space<vmem>>, vector<8x32xf32>,
    } else {
    }
    %c0 = arith.constant 0 : index
    %c0_1 = arith.constant 0 : index
    %3 = vector.load %arg1[%c0, %c0_1] : memref<64x32xf32, #tpu.memory_space<vmem>>, vector<64x32xf32>
    %c0_2 = arith.constant 0 : index
    %c0_3 = arith.constant 0 : index
    %4 = vector.load %arg2[%c0_2, %c0_3] : memref<32x128xf32, #tpu.memory_space<vmem>>, vector<32x128xf32>
    %cst = arith.constant dense<0.000000e+00> : vector<64x128xf32>
    %5 = tpu.matmul %3, %4, %cst {dimension_numbers = #tpu.dot_dimension_numbers<[1], [0], [0], [1], [0, 0, 1, 1], [], []>} : vector<64x32xf32>, vector<32x128xf32>, vector<64x128xf32> -> vector<64x128xf32>
    %c0_4 = arith.constant 0 : index
    %c0_5 = arith.constant 0 : index
    %6 = vector.load %arg4[%c0_4, %c0_5] : memref<1x128xf32, #tpu.memory_space<vmem>>, vector<1x128xf32>
    %7 = vector.broadcast %6 : vector<1x128xf32> to vector<64x128xf32>
    %8 = arith.addf %5, %7 : vector<64x128xf32>
    %c0_6 = arith.constant 0 : index
    %c0_7 = arith.constant 0 : index
    %9 = vector.load %arg8[%c0_6, %c0_7] : memref<64x128xf32, #tpu.memory_space<vmem>>, vector<64x128xf32>
    tpu.vector_store %arg8[%c0_6, %c0_7], %8 {strides = array<i32>} : memref<64x128xf32, #tpu.memory_space<vmem>>, vector<64x128xf32>,
    %c0_8 = arith.constant 0 : index
    %c0_9 = arith.constant 0 : index
    %10 = vector.load %arg3[%c0_8, %c0_9] : memref<32x128xf32, #tpu.memory_space<vmem>>, vector<32x128xf32>
    %c0_10 = arith.constant 0 : index
    %c0_11 = arith.constant 0 : index
    %11 = vector.load %arg6[%c0_10, %c0_11] : memref<8x32xf32, #tpu.memory_space<vmem>>, vector<8x32xf32>
    %c0_12 = arith.constant 0 : index
    %c0_13 = arith.constant 0 : index
    %12 = vector.load %arg7[%c0_12, %c0_13] : memref<8x32xf32, #tpu.memory_space<vmem>>, vector<8x32xf32>
    %c0_i32_14 = arith.constant 0 : i32
    %c8_i32 = arith.constant 8 : i32
    %13 = arith.muli %c0_i32_14, %c8_i32 : i32
    %14 = tpu.assume_multiple %13, 8 : i32
    %15 = arith.index_cast %14 : i32 to index
    %c0_15 = arith.constant 0 : index
    %16 = vector.load %arg8[%15, %c0_15] : memref<64x128xf32, #tpu.memory_space<vmem>>, vector<8x128xf32>
    %cst_16 = arith.constant dense<0.000000e+00> : vector<8x128xf32>
    %17 = tpu.matmul %11, %10, %cst_16 {dimension_numbers = #tpu.dot_dimension_numbers<[1], [0], [0], [1], [0, 0, 1, 1], [], []>} : vector<8x32xf32>, vector<32x128xf32>, vector<8x128xf32> -> vector<8x128xf32>
    %18 = arith.addf %16, %17 : vector<8x128xf32>
    %19 = vector.extract_strided_slice %18 {offsets = [0, 0], sizes = [8, 96], strides = [1, 1]} : vector<8x128xf32> to vector<8x96xf32>
    %20 = arith.negf %19 : vector<8x96xf32>
    %21 = math.exp %20 : vector<8x96xf32>
    %cst_17 = arith.constant 1.000000e+00 : f32
    %22 = vector.broadcast %cst_17 : f32 to vector<8x96xf32>
    %23 = arith.addf %22, %21 : vector<8x96xf32>
    %24 = arith.divf %22, %23 : vector<8x96xf32>
    %25 = vector.extract_strided_slice %24 {offsets = [0, 0], sizes = [8, 32], strides = [1, 1]} : vector<8x96xf32> to vector<8x32xf32>
    %26 = vector.extract_strided_slice %24 {offsets = [0, 32], sizes = [8, 32], strides = [1, 1]} : vector<8x96xf32> to vector<8x32xf32>
    %27 = vector.extract_strided_slice %24 {offsets = [0, 64], sizes = [8, 32], strides = [1, 1]} : vector<8x96xf32> to vector<8x32xf32>
    %28 = vector.extract_strided_slice %18 {offsets = [0, 96], sizes = [8, 32], strides = [1, 1]} : vector<8x128xf32> to vector<8x32xf32>
    %29 = math.tanh %28 : vector<8x32xf32>
    %30 = arith.mulf %26, %12 : vector<8x32xf32>
    %31 = arith.mulf %25, %29 : vector<8x32xf32>
    %32 = arith.addf %30, %31 : vector<8x32xf32>
    %33 = math.tanh %32 : vector<8x32xf32>
    %34 = arith.mulf %27, %33 : vector<8x32xf32>
    %35 = arith.index_cast %14 : i32 to index
    %c0_18 = arith.constant 0 : index
    %36 = vector.load %arg5[%35, %c0_18] : memref<64x32xf32, #tpu.memory_space<vmem>>, vector<8x32xf32>
    tpu.vector_store %arg5[%35, %c0_18], %34 {strides = array<i32>} : memref<64x32xf32, #tpu.memory_space<vmem>>, vector<8x32xf32>,
    %c1_i32 = arith.constant 1 : i32
    %c8_i32_19 = arith.constant 8 : i32
    %37 = arith.muli %c1_i32, %c8_i32_19 : i32
    %38 = tpu.assume_multiple %37, 8 : i32
    %39 = arith.index_cast %38 : i32 to index
    %c0_20 = arith.constant 0 : index
    %40 = vector.load %arg8[%39, %c0_20] : memref<64x128xf32, #tpu.memory_space<vmem>>, vector<8x128xf32>
    %cst_21 = arith.constant dense<0.000000e+00> : vector<8x128xf32>
    %41 = tpu.matmul %34, %10, %cst_21 {dimension_numbers = #tpu.dot_dimension_numbers<[1], [0], [0], [1], [0, 0, 1, 1], [], []>} : vector<8x32xf32>, vector<32x128xf32>, vector<8x128xf32> -> vector<8x128xf32>
    %42 = arith.addf %40, %41 : vector<8x128xf32>
    %43 = vector.extract_strided_slice %42 {offsets = [0, 0], sizes = [8, 96], strides = [1, 1]} : vector<8x128xf32> to vector<8x96xf32>
    %44 = arith.negf %43 : vector<8x96xf32>
    %45 = math.exp %44 : vector<8x96xf32>
    %cst_22 = arith.constant 1.000000e+00 : f32
    %46 = vector.broadcast %cst_22 : f32 to vector<8x96xf32>
    %47 = arith.addf %46, %45 : vector<8x96xf32>
    %48 = arith.divf %46, %47 : vector<8x96xf32>
    %49 = vector.extract_strided_slice %48 {offsets = [0, 0], sizes = [8, 32], strides = [1, 1]} : vector<8x96xf32> to vector<8x32xf32>
    %50 = vector.extract_strided_slice %48 {offsets = [0, 32], sizes = [8, 32], strides = [1, 1]} : vector<8x96xf32> to vector<8x32xf32>
    %51 = vector.extract_strided_slice %48 {offsets = [0, 64], sizes = [8, 32], strides = [1, 1]} : vector<8x96xf32> to vector<8x32xf32>
    %52 = vector.extract_strided_slice %42 {offsets = [0, 96], sizes = [8, 32], strides = [1, 1]} : vector<8x128xf32> to vector<8x32xf32>
    %53 = math.tanh %52 : vector<8x32xf32>
    %54 = arith.mulf %50, %32 : vector<8x32xf32>
    %55 = arith.mulf %49, %53 : vector<8x32xf32>
    %56 = arith.addf %54, %55 : vector<8x32xf32>
    %57 = math.tanh %56 : vector<8x32xf32>
    %58 = arith.mulf %51, %57 : vector<8x32xf32>
    %59 = arith.index_cast %38 : i32 to index
    %c0_23 = arith.constant 0 : index
    %60 = vector.load %arg5[%59, %c0_23] : memref<64x32xf32, #tpu.memory_space<vmem>>, vector<8x32xf32>
    tpu.vector_store %arg5[%59, %c0_23], %58 {strides = array<i32>} : memref<64x32xf32, #tpu.memory_space<vmem>>, vector<8x32xf32>,
    %c2_i32 = arith.constant 2 : i32
    %c8_i32_24 = arith.constant 8 : i32
    %61 = arith.muli %c2_i32, %c8_i32_24 : i32
    %62 = tpu.assume_multiple %61, 8 : i32
    %63 = arith.index_cast %62 : i32 to index
    %c0_25 = arith.constant 0 : index
    %64 = vector.load %arg8[%63, %c0_25] : memref<64x128xf32, #tpu.memory_space<vmem>>, vector<8x128xf32>
    %cst_26 = arith.constant dense<0.000000e+00> : vector<8x128xf32>
    %65 = tpu.matmul %58, %10, %cst_26 {dimension_numbers = #tpu.dot_dimension_numbers<[1], [0], [0], [1], [0, 0, 1, 1], [], []>} : vector<8x32xf32>, vector<32x128xf32>, vector<8x128xf32> -> vector<8x128xf32>
    %66 = arith.addf %64, %65 : vector<8x128xf32>
    %67 = vector.extract_strided_slice %66 {offsets = [0, 0], sizes = [8, 96], strides = [1, 1]} : vector<8x128xf32> to vector<8x96xf32>
    %68 = arith.negf %67 : vector<8x96xf32>
    %69 = math.exp %68 : vector<8x96xf32>
    %cst_27 = arith.constant 1.000000e+00 : f32
    %70 = vector.broadcast %cst_27 : f32 to vector<8x96xf32>
    %71 = arith.addf %70, %69 : vector<8x96xf32>
    %72 = arith.divf %70, %71 : vector<8x96xf32>
    %73 = vector.extract_strided_slice %72 {offsets = [0, 0], sizes = [8, 32], strides = [1, 1]} : vector<8x96xf32> to vector<8x32xf32>
    %74 = vector.extract_strided_slice %72 {offsets = [0, 32], sizes = [8, 32], strides = [1, 1]} : vector<8x96xf32> to vector<8x32xf32>
    %75 = vector.extract_strided_slice %72 {offsets = [0, 64], sizes = [8, 32], strides = [1, 1]} : vector<8x96xf32> to vector<8x32xf32>
    %76 = vector.extract_strided_slice %66 {offsets = [0, 96], sizes = [8, 32], strides = [1, 1]} : vector<8x128xf32> to vector<8x32xf32>
    %77 = math.tanh %76 : vector<8x32xf32>
    %78 = arith.mulf %74, %56 : vector<8x32xf32>
    %79 = arith.mulf %73, %77 : vector<8x32xf32>
    %80 = arith.addf %78, %79 : vector<8x32xf32>
    %81 = math.tanh %80 : vector<8x32xf32>
    %82 = arith.mulf %75, %81 : vector<8x32xf32>
    %83 = arith.index_cast %62 : i32 to index
    %c0_28 = arith.constant 0 : index
    %84 = vector.load %arg5[%83, %c0_28] : memref<64x32xf32, #tpu.memory_space<vmem>>, vector<8x32xf32>
    tpu.vector_store %arg5[%83, %c0_28], %82 {strides = array<i32>} : memref<64x32xf32, #tpu.memory_space<vmem>>, vector<8x32xf32>,
    %c3_i32 = arith.constant 3 : i32
    %c8_i32_29 = arith.constant 8 : i32
    %85 = arith.muli %c3_i32, %c8_i32_29 : i32
    %86 = tpu.assume_multiple %85, 8 : i32
    %87 = arith.index_cast %86 : i32 to index
    %c0_30 = arith.constant 0 : index
    %88 = vector.load %arg8[%87, %c0_30] : memref<64x128xf32, #tpu.memory_space<vmem>>, vector<8x128xf32>
    %cst_31 = arith.constant dense<0.000000e+00> : vector<8x128xf32>
    %89 = tpu.matmul %82, %10, %cst_31 {dimension_numbers = #tpu.dot_dimension_numbers<[1], [0], [0], [1], [0, 0, 1, 1], [], []>} : vector<8x32xf32>, vector<32x128xf32>, vector<8x128xf32> -> vector<8x128xf32>
    %90 = arith.addf %88, %89 : vector<8x128xf32>
    %91 = vector.extract_strided_slice %90 {offsets = [0, 0], sizes = [8, 96], strides = [1, 1]} : vector<8x128xf32> to vector<8x96xf32>
    %92 = arith.negf %91 : vector<8x96xf32>
    %93 = math.exp %92 : vector<8x96xf32>
    %cst_32 = arith.constant 1.000000e+00 : f32
    %94 = vector.broadcast %cst_32 : f32 to vector<8x96xf32>
    %95 = arith.addf %94, %93 : vector<8x96xf32>
    %96 = arith.divf %94, %95 : vector<8x96xf32>
    %97 = vector.extract_strided_slice %96 {offsets = [0, 0], sizes = [8, 32], strides = [1, 1]} : vector<8x96xf32> to vector<8x32xf32>
    %98 = vector.extract_strided_slice %96 {offsets = [0, 32], sizes = [8, 32], strides = [1, 1]} : vector<8x96xf32> to vector<8x32xf32>
    %99 = vector.extract_strided_slice %96 {offsets = [0, 64], sizes = [8, 32], strides = [1, 1]} : vector<8x96xf32> to vector<8x32xf32>
    %100 = vector.extract_strided_slice %90 {offsets = [0, 96], sizes = [8, 32], strides = [1, 1]} : vector<8x128xf32> to vector<8x32xf32>
    %101 = math.tanh %100 : vector<8x32xf32>
    %102 = arith.mulf %98, %80 : vector<8x32xf32>
    %103 = arith.mulf %97, %101 : vector<8x32xf32>
    %104 = arith.addf %102, %103 : vector<8x32xf32>
    %105 = math.tanh %104 : vector<8x32xf32>
    %106 = arith.mulf %99, %105 : vector<8x32xf32>
    %107 = arith.index_cast %86 : i32 to index
    %c0_33 = arith.constant 0 : index
    %108 = vector.load %arg5[%107, %c0_33] : memref<64x32xf32, #tpu.memory_space<vmem>>, vector<8x32xf32>
    tpu.vector_store %arg5[%107, %c0_33], %106 {strides = array<i32>} : memref<64x32xf32, #tpu.memory_space<vmem>>, vector<8x32xf32>,
    %c4_i32 = arith.constant 4 : i32
    %c8_i32_34 = arith.constant 8 : i32
    %109 = arith.muli %c4_i32, %c8_i32_34 : i32
    %110 = tpu.assume_multiple %109, 8 : i32
    %111 = arith.index_cast %110 : i32 to index
    %c0_35 = arith.constant 0 : index
    %112 = vector.load %arg8[%111, %c0_35] : memref<64x128xf32, #tpu.memory_space<vmem>>, vector<8x128xf32>
    %cst_36 = arith.constant dense<0.000000e+00> : vector<8x128xf32>
    %113 = tpu.matmul %106, %10, %cst_36 {dimension_numbers = #tpu.dot_dimension_numbers<[1], [0], [0], [1], [0, 0, 1, 1], [], []>} : vector<8x32xf32>, vector<32x128xf32>, vector<8x128xf32> -> vector<8x128xf32>
    %114 = arith.addf %112, %113 : vector<8x128xf32>
    %115 = vector.extract_strided_slice %114 {offsets = [0, 0], sizes = [8, 96], strides = [1, 1]} : vector<8x128xf32> to vector<8x96xf32>
    %116 = arith.negf %115 : vector<8x96xf32>
    %117 = math.exp %116 : vector<8x96xf32>
    %cst_37 = arith.constant 1.000000e+00 : f32
    %118 = vector.broadcast %cst_37 : f32 to vector<8x96xf32>
    %119 = arith.addf %118, %117 : vector<8x96xf32>
    %120 = arith.divf %118, %119 : vector<8x96xf32>
    %121 = vector.extract_strided_slice %120 {offsets = [0, 0], sizes = [8, 32], strides = [1, 1]} : vector<8x96xf32> to vector<8x32xf32>
    %122 = vector.extract_strided_slice %120 {offsets = [0, 32], sizes = [8, 32], strides = [1, 1]} : vector<8x96xf32> to vector<8x32xf32>
    %123 = vector.extract_strided_slice %120 {offsets = [0, 64], sizes = [8, 32], strides = [1, 1]} : vector<8x96xf32> to vector<8x32xf32>
    %124 = vector.extract_strided_slice %114 {offsets = [0, 96], sizes = [8, 32], strides = [1, 1]} : vector<8x128xf32> to vector<8x32xf32>
    %125 = math.tanh %124 : vector<8x32xf32>
    %126 = arith.mulf %122, %104 : vector<8x32xf32>
    %127 = arith.mulf %121, %125 : vector<8x32xf32>
    %128 = arith.addf %126, %127 : vector<8x32xf32>
    %129 = math.tanh %128 : vector<8x32xf32>
    %130 = arith.mulf %123, %129 : vector<8x32xf32>
    %131 = arith.index_cast %110 : i32 to index
    %c0_38 = arith.constant 0 : index
    %132 = vector.load %arg5[%131, %c0_38] : memref<64x32xf32, #tpu.memory_space<vmem>>, vector<8x32xf32>
    tpu.vector_store %arg5[%131, %c0_38], %130 {strides = array<i32>} : memref<64x32xf32, #tpu.memory_space<vmem>>, vector<8x32xf32>,
    %c5_i32 = arith.constant 5 : i32
    %c8_i32_39 = arith.constant 8 : i32
    %133 = arith.muli %c5_i32, %c8_i32_39 : i32
    %134 = tpu.assume_multiple %133, 8 : i32
    %135 = arith.index_cast %134 : i32 to index
    %c0_40 = arith.constant 0 : index
    %136 = vector.load %arg8[%135, %c0_40] : memref<64x128xf32, #tpu.memory_space<vmem>>, vector<8x128xf32>
    %cst_41 = arith.constant dense<0.000000e+00> : vector<8x128xf32>
    %137 = tpu.matmul %130, %10, %cst_41 {dimension_numbers = #tpu.dot_dimension_numbers<[1], [0], [0], [1], [0, 0, 1, 1], [], []>} : vector<8x32xf32>, vector<32x128xf32>, vector<8x128xf32> -> vector<8x128xf32>
    %138 = arith.addf %136, %137 : vector<8x128xf32>
    %139 = vector.extract_strided_slice %138 {offsets = [0, 0], sizes = [8, 96], strides = [1, 1]} : vector<8x128xf32> to vector<8x96xf32>
    %140 = arith.negf %139 : vector<8x96xf32>
    %141 = math.exp %140 : vector<8x96xf32>
    %cst_42 = arith.constant 1.000000e+00 : f32
    %142 = vector.broadcast %cst_42 : f32 to vector<8x96xf32>
    %143 = arith.addf %142, %141 : vector<8x96xf32>
    %144 = arith.divf %142, %143 : vector<8x96xf32>
    %145 = vector.extract_strided_slice %144 {offsets = [0, 0], sizes = [8, 32], strides = [1, 1]} : vector<8x96xf32> to vector<8x32xf32>
    %146 = vector.extract_strided_slice %144 {offsets = [0, 32], sizes = [8, 32], strides = [1, 1]} : vector<8x96xf32> to vector<8x32xf32>
    %147 = vector.extract_strided_slice %144 {offsets = [0, 64], sizes = [8, 32], strides = [1, 1]} : vector<8x96xf32> to vector<8x32xf32>
    %148 = vector.extract_strided_slice %138 {offsets = [0, 96], sizes = [8, 32], strides = [1, 1]} : vector<8x128xf32> to vector<8x32xf32>
    %149 = math.tanh %148 : vector<8x32xf32>
    %150 = arith.mulf %146, %128 : vector<8x32xf32>
    %151 = arith.mulf %145, %149 : vector<8x32xf32>
    %152 = arith.addf %150, %151 : vector<8x32xf32>
    %153 = math.tanh %152 : vector<8x32xf32>
    %154 = arith.mulf %147, %153 : vector<8x32xf32>
    %155 = arith.index_cast %134 : i32 to index
    %c0_43 = arith.constant 0 : index
    %156 = vector.load %arg5[%155, %c0_43] : memref<64x32xf32, #tpu.memory_space<vmem>>, vector<8x32xf32>
    tpu.vector_store %arg5[%155, %c0_43], %154 {strides = array<i32>} : memref<64x32xf32, #tpu.memory_space<vmem>>, vector<8x32xf32>,
    %c6_i32 = arith.constant 6 : i32
    %c8_i32_44 = arith.constant 8 : i32
    %157 = arith.muli %c6_i32, %c8_i32_44 : i32
    %158 = tpu.assume_multiple %157, 8 : i32
    %159 = arith.index_cast %158 : i32 to index
    %c0_45 = arith.constant 0 : index
    %160 = vector.load %arg8[%159, %c0_45] : memref<64x128xf32, #tpu.memory_space<vmem>>, vector<8x128xf32>
    %cst_46 = arith.constant dense<0.000000e+00> : vector<8x128xf32>
    %161 = tpu.matmul %154, %10, %cst_46 {dimension_numbers = #tpu.dot_dimension_numbers<[1], [0], [0], [1], [0, 0, 1, 1], [], []>} : vector<8x32xf32>, vector<32x128xf32>, vector<8x128xf32> -> vector<8x128xf32>
    %162 = arith.addf %160, %161 : vector<8x128xf32>
    %163 = vector.extract_strided_slice %162 {offsets = [0, 0], sizes = [8, 96], strides = [1, 1]} : vector<8x128xf32> to vector<8x96xf32>
    %164 = arith.negf %163 : vector<8x96xf32>
    %165 = math.exp %164 : vector<8x96xf32>
    %cst_47 = arith.constant 1.000000e+00 : f32
    %166 = vector.broadcast %cst_47 : f32 to vector<8x96xf32>
    %167 = arith.addf %166, %165 : vector<8x96xf32>
    %168 = arith.divf %166, %167 : vector<8x96xf32>
    %169 = vector.extract_strided_slice %168 {offsets = [0, 0], sizes = [8, 32], strides = [1, 1]} : vector<8x96xf32> to vector<8x32xf32>
    %170 = vector.extract_strided_slice %168 {offsets = [0, 32], sizes = [8, 32], strides = [1, 1]} : vector<8x96xf32> to vector<8x32xf32>
    %171 = vector.extract_strided_slice %168 {offsets = [0, 64], sizes = [8, 32], strides = [1, 1]} : vector<8x96xf32> to vector<8x32xf32>
    %172 = vector.extract_strided_slice %162 {offsets = [0, 96], sizes = [8, 32], strides = [1, 1]} : vector<8x128xf32> to vector<8x32xf32>
    %173 = math.tanh %172 : vector<8x32xf32>
    %174 = arith.mulf %170, %152 : vector<8x32xf32>
    %175 = arith.mulf %169, %173 : vector<8x32xf32>
    %176 = arith.addf %174, %175 : vector<8x32xf32>
    %177 = math.tanh %176 : vector<8x32xf32>
    %178 = arith.mulf %171, %177 : vector<8x32xf32>
    %179 = arith.index_cast %158 : i32 to index
    %c0_48 = arith.constant 0 : index
    %180 = vector.load %arg5[%179, %c0_48] : memref<64x32xf32, #tpu.memory_space<vmem>>, vector<8x32xf32>
    tpu.vector_store %arg5[%179, %c0_48], %178 {strides = array<i32>} : memref<64x32xf32, #tpu.memory_space<vmem>>, vector<8x32xf32>,
    %c7_i32 = arith.constant 7 : i32
    %c8_i32_49 = arith.constant 8 : i32
    %181 = arith.muli %c7_i32, %c8_i32_49 : i32
    %182 = tpu.assume_multiple %181, 8 : i32
    %183 = arith.index_cast %182 : i32 to index
    %c0_50 = arith.constant 0 : index
    %184 = vector.load %arg8[%183, %c0_50] : memref<64x128xf32, #tpu.memory_space<vmem>>, vector<8x128xf32>
    %cst_51 = arith.constant dense<0.000000e+00> : vector<8x128xf32>
    %185 = tpu.matmul %178, %10, %cst_51 {dimension_numbers = #tpu.dot_dimension_numbers<[1], [0], [0], [1], [0, 0, 1, 1], [], []>} : vector<8x32xf32>, vector<32x128xf32>, vector<8x128xf32> -> vector<8x128xf32>
    %186 = arith.addf %184, %185 : vector<8x128xf32>
    %187 = vector.extract_strided_slice %186 {offsets = [0, 0], sizes = [8, 96], strides = [1, 1]} : vector<8x128xf32> to vector<8x96xf32>
    %188 = arith.negf %187 : vector<8x96xf32>
    %189 = math.exp %188 : vector<8x96xf32>
    %cst_52 = arith.constant 1.000000e+00 : f32
    %190 = vector.broadcast %cst_52 : f32 to vector<8x96xf32>
    %191 = arith.addf %190, %189 : vector<8x96xf32>
    %192 = arith.divf %190, %191 : vector<8x96xf32>
    %193 = vector.extract_strided_slice %192 {offsets = [0, 0], sizes = [8, 32], strides = [1, 1]} : vector<8x96xf32> to vector<8x32xf32>
    %194 = vector.extract_strided_slice %192 {offsets = [0, 32], sizes = [8, 32], strides = [1, 1]} : vector<8x96xf32> to vector<8x32xf32>
    %195 = vector.extract_strided_slice %192 {offsets = [0, 64], sizes = [8, 32], strides = [1, 1]} : vector<8x96xf32> to vector<8x32xf32>
    %196 = vector.extract_strided_slice %186 {offsets = [0, 96], sizes = [8, 32], strides = [1, 1]} : vector<8x128xf32> to vector<8x32xf32>
    %197 = math.tanh %196 : vector<8x32xf32>
    %198 = arith.mulf %194, %176 : vector<8x32xf32>
    %199 = arith.mulf %193, %197 : vector<8x32xf32>
    %200 = arith.addf %198, %199 : vector<8x32xf32>
    %201 = math.tanh %200 : vector<8x32xf32>
    %202 = arith.mulf %195, %201 : vector<8x32xf32>
    %203 = arith.index_cast %182 : i32 to index
    %c0_53 = arith.constant 0 : index
    %204 = vector.load %arg5[%203, %c0_53] : memref<64x32xf32, #tpu.memory_space<vmem>>, vector<8x32xf32>
    tpu.vector_store %arg5[%203, %c0_53], %202 {strides = array<i32>} : memref<64x32xf32, #tpu.memory_space<vmem>>, vector<8x32xf32>,
    %c8_i32_54 = arith.constant 8 : i32
    %c0_55 = arith.constant 0 : index
    %c0_56 = arith.constant 0 : index
    %205 = vector.load %arg6[%c0_55, %c0_56] : memref<8x32xf32, #tpu.memory_space<vmem>>, vector<8x32xf32>
    tpu.vector_store %arg6[%c0_55, %c0_56], %202 {strides = array<i32>} : memref<8x32xf32, #tpu.memory_space<vmem>>, vector<8x32xf32>,
    %c0_57 = arith.constant 0 : index
    %c0_58 = arith.constant 0 : index
    %206 = vector.load %arg7[%c0_57, %c0_58] : memref<8x32xf32, #tpu.memory_space<vmem>>, vector<8x32xf32>
    tpu.vector_store %arg7[%c0_57, %c0_58], %200 {strides = array<i32>} : memref<8x32xf32, #tpu.memory_space<vmem>>, vector<8x32xf32>,
    return
  }
  func.func @transform_0(%arg0: i32) -> (i32, i32) {
    %c0_i32 = arith.constant 0 : i32
    %c0_i32_0 = arith.constant 0 : i32
    return %arg0, %c0_i32 : i32, i32
  }
  func.func @transform_1(%arg0: i32) -> (i32, i32) {
    %c0_i32 = arith.constant 0 : i32
    %c0_i32_0 = arith.constant 0 : i32
    %c0_i32_1 = arith.constant 0 : i32
    return %c0_i32, %c0_i32_0 : i32, i32
  }
  func.func @transform_2(%arg0: i32) -> (i32, i32) {
    %c0_i32 = arith.constant 0 : i32
    %c0_i32_0 = arith.constant 0 : i32
    %c0_i32_1 = arith.constant 0 : i32
    return %c0_i32, %c0_i32_0 : i32, i32
  }
  func.func @transform_3(%arg0: i32) -> (i32, i32) {
    %c0_i32 = arith.constant 0 : i32
    %c0_i32_0 = arith.constant 0 : i32
    %c0_i32_1 = arith.constant 0 : i32
    return %c0_i32, %c0_i32_0 : i32, i32
  }
  func.func @transform_4(%arg0: i32) -> (i32, i32) {
    %c0_i32 = arith.constant 0 : i32
    %c0_i32_0 = arith.constant 0 : i32
    return %arg0, %c0_i32 : i32, i32
  }
  func.func @transform_5(%arg0: i32) -> (i32, i32) {
    %c0_i32 = arith.constant 0 : i32
    %c0_i32_0 = arith.constant 0 : i32
    %c0_i32_1 = arith.constant 0 : i32
    return %c0_i32, %c0_i32_0 : i32, i32
  }
  func.func @transform_6(%arg0: i32) -> (i32, i32) {
    %c0_i32 = arith.constant 0 : i32
    %c0_i32_0 = arith.constant 0 : i32
    %c0_i32_1 = arith.constant 0 : i32
    return %c0_i32, %c0_i32_0 : i32, i32
  }
}

</mosaic_0001>

<llo_original>
// kernel: tpu_custom_call.1
$region0: #{tpu_custom_call.1}
  #allocation0 [shape = 'u32[]', space=smem, size = 0x4, offset = 0x4, fixed_abs, tag = 'smem constant byte address 0x4 - core index']
  #allocation1 [shape = 'u32[144,128]{1,0:T(1,128)}', space=vmem, size = 0x12000, scoped, tag = 'internal scratch']
  #allocation2 [shape = 'f32[64,128]{1,0:T(8,128)}', space=vmem, size = 0x8000, scoped, tag = 'scratch operand']
  %s0 = inlined_call_operand.vmem [shape: f32[64,32], index: 0, kind: input, shape index: {}]
  %s1 = inlined_call_operand.vmem [shape: f32[32,128], index: 1, kind: input, shape index: {}]
  %s2 = inlined_call_operand.vmem [shape: f32[32,128], index: 2, kind: input, shape index: {}]
  %s3 = inlined_call_operand.vmem [shape: f32[1,128], index: 3, kind: input, shape index: {}]
  %s4 = inlined_call_operand.vmem [shape: f32[64,32], index: 4, kind: output, shape index: {0}]
  %s5 = inlined_call_operand.hbm [shape: f32[8,32], index: 5, kind: output, shape index: {1}]
  %s6 = inlined_call_operand.hbm [shape: f32[8,32], index: 6, kind: output, shape index: {2}]
  %7 = xla_tuple %s4, %s5, %s6
  %s8 = sld [smem:[#allocation0]]
  $region46: #{tpu_custom_call.1} parent=0
    _
  %s10 = ssub.s32 1, %s8
  %s11 = scalar_select 0, %s10, %s8
  $region1: #{tpu_custom_call.1} parent=0
    #allocation3 [shape = 'u8[4096]{0}', space=vmem, size = 0x1000, scoped, tag = 'output window, operand 1, single buffered']
    #allocation4 [shape = 's32[1]{0}', space=sflag, size = 0x4, scoped, tag = 'scoped memory for tpu_custom_call.1']
    #allocation5 [shape = 'u8[4096]{0}', space=vmem, size = 0x1000, scoped, tag = 'output window, operand 2, single buffered']
    #allocation6 [shape = 's32[1]{0}', space=sflag, size = 0x4, scoped, tag = 'scoped memory for tpu_custom_call.1']
    %12 = vsyncpa [#allocation4], 0
    %13 = vsyncpa [#allocation6], 0
    // Predicated region
    $region2: #{tpu_custom_call.1} parent=1 // pred_check
      _
    $region3: #{tpu_custom_call.1} parent=1 // pred_check_branch
      %15 = sbr.rel (0) target = $region5
    $region4: #{tpu_custom_call.1} parent=1 // pred_region
      _
    $region5: #{tpu_custom_call.1} parent=1 // pred_fallthru
      _
    // Predicated region
    $region6: #{tpu_custom_call.1} parent=1 // pred_check
      _
    $region7: #{tpu_custom_call.1} parent=1 // pred_check_branch
      %17 = sbr.rel (0) target = $region9
    $region8: #{tpu_custom_call.1} parent=1 // pred_region
      _
    $region9: #{tpu_custom_call.1} parent=1 // pred_fallthru
      _
    // Predicated region
    $region10: #{tpu_custom_call.1} parent=1 // pred_check
      _
    $region11: #{tpu_custom_call.1} parent=1 // pred_check_branch
      %19 = sbr.rel (0) target = $region13
    $region12: #{tpu_custom_call.1} parent=1 // pred_region
      _
    $region13: #{tpu_custom_call.1} parent=1 // pred_fallthru
      _
    // Predicated region
    $region14: #{tpu_custom_call.1} parent=1 // pred_check
      _
    $region15: #{tpu_custom_call.1} parent=1 // pred_check_branch
      %21 = sbr.rel (0) target = $region17
    $region16: #{tpu_custom_call.1} parent=1 // pred_region
      _
    $region17: #{tpu_custom_call.1} parent=1 // pred_fallthru
      _
    %p22 = scmp.eq.s32.totalorder 0, 0
    // Predicated region
    $region18: #{tpu_custom_call.1} parent=1 // pred_check
      %p23 = pneg %p22
    $region19: #{tpu_custom_call.1} parent=1 // pred_check_branch
      %25 = sbr.rel (%p23) target = $region21
    $region20: #{tpu_custom_call.1} parent=1 // pred_region
      %vm26 = vcmask 261120
      %27 = vst.msk [vmem:[#allocation3] sm:$0xff] %vm26, 0.0
      %28 = vst.msk [vmem:[#allocation5] sm:$0xff] %vm26, 0.0
    $region21: #{tpu_custom_call.1} parent=1 // pred_fallthru
      _
    %v29 = vld [vmem:[%s0] sm:$0xff]
    %v30 = vld [vmem:[%s0 + $0x8] sm:$0xff]
    %v31 = vld [vmem:[%s0 + $0x10] sm:$0xff]
    %v32 = vld [vmem:[%s0 + $0x18] sm:$0xff]
    %v33 = vld [vmem:[%s0 + $0x20] sm:$0xff]
    %v34 = vld [vmem:[%s0 + $0x28] sm:$0xff]
    %v35 = vld [vmem:[%s0 + $0x30] sm:$0xff]
    %v36 = vld [vmem:[%s0 + $0x38] sm:$0xff]
    %v37 = vld [vmem:[%s1] sm:$0xff]
    %v38 = vld [vmem:[%s1 + $0x8] sm:$0xff]
    %v39 = vld [vmem:[%s1 + $0x10] sm:$0xff]
    %v40 = vld [vmem:[%s1 + $0x18] sm:$0xff]
    %v41 = vld [vmem:[%s3] sm:$0x1]
    %v43 = vlaneseq
    %v44 = vshrl.u32 %v43, 7
    %v45 = vsub.s32 0, %v44
    %v46 = vrot.slane %v41, %v45
    %vm48 = vcmask 261120
    %v50 = vsel %vm48, %v29, 0
    %v53 = vsel %vm48, %v30, 0
    %v56 = vsel %vm48, %v31, 0
    %v59 = vsel %vm48, %v32, 0
    %v62 = vsel %vm48, %v33, 0
    %v65 = vsel %vm48, %v34, 0
    %v68 = vsel %vm48, %v35, 0
    %v71 = vsel %vm48, %v36, 0
    %73 = vmatprep.subr.mxu0 0.0
    %74 = vmatpush1.msra.mxu0 %v37
    %75 = vmatprep.subr.mxu0 0.0
    %76 = vmatpush1.msra.mxu0 %v38
    %77 = vmatprep.subr.mxu0 0.0
    %78 = vmatpush1.msra.mxu0 %v39
    %79 = vmatprep.subr.mxu0 0.0
    %80 = vmatpush1.msra.mxu0 %v40
    %81 = vmatprep.subr.mxu0 0.0
    %82 = vmatpush1.msra.mxu0 0.0
    %83 = vmatprep.subr.mxu0 0.0
    %84 = vmatpush1.msra.mxu0 0.0
    %85 = vmatprep.subr.mxu0 0.0
    %86 = vmatpush1.msra.mxu0 0.0
    %87 = vmatprep.subr.mxu0 0.0
    %88 = vmatpush1.msra.mxu0 0.0
    %89 = vmatprep.subr.mxu0 0.0
    %90 = vmatpush1.msra.mxu0 0.0
    %91 = vmatprep.subr.mxu0 0.0
    %92 = vmatpush1.msra.mxu0 0.0
    %93 = vmatprep.subr.mxu0 0.0
    %94 = vmatpush1.msra.mxu0 0.0
    %95 = vmatprep.subr.mxu0 0.0
    %96 = vmatpush1.msra.mxu0 0.0
    %97 = vmatprep.subr.mxu0 0.0
    %98 = vmatpush1.msra.mxu0 0.0
    %99 = vmatprep.subr.mxu0 0.0
    %100 = vmatpush1.msra.mxu0 0.0
    %101 = vmatprep.subr.mxu0 0.0
    %102 = vmatpush1.msra.mxu0 0.0
    %103 = vmatprep.subr.mxu0 0.0
    %104 = vmatpush1.msra.mxu0 0.0
    %105 = vmatprep.subr.mxu0 0.0
    %106 = vmatpush1.msra.mxu0 0.0
    %107 = vmatprep.subr.mxu0 0.0
    %108 = vmatpush1.msra.mxu0 0.0
    %109 = vmatprep.subr.mxu0 0.0
    %110 = vmatpush1.msra.mxu0 0.0
    %111 = vmatprep.subr.mxu0 0.0
    %112 = vmatpush1.msra.mxu0 0.0
    %113 = vmatprep.subr.mxu0 0.0
    %114 = vmatpush1.msra.mxu0 0.0
    %115 = vmatprep.subr.mxu0 0.0
    %116 = vmatpush1.msra.mxu0 0.0
    %117 = vmatprep.subr.mxu0 0.0
    %118 = vmatpush1.msra.mxu0 0.0
    %119 = vmatprep.subr.mxu0 0.0
    %120 = vmatpush1.msra.mxu0 0.0
    %121 = vmatprep.subr.mxu0 0.0
    %122 = vmatpush1.msra.mxu0 0.0
    %123 = vmatprep.subr.mxu0 0.0
    %124 = vmatpush1.msra.mxu0 0.0
    %125 = vmatprep.subr.mxu0 0.0
    %126 = vmatpush1.msra.mxu0 0.0
    %127 = vmatprep.subr.mxu0 0.0
    %128 = vmatpush1.msra.mxu0 0.0
    %129 = vmatprep.subr.mxu0 0.0
    %130 = vmatpush1.msra.mxu0 0.0
    %131 = vmatprep.subr.mxu0 0.0
    %132 = vmatpush1.msra.mxu0 0.0
    %133 = vmatprep.subr.mxu0 0.0
    %134 = vmatpush1.msra.mxu0 0.0
    %135 = vmatprep.subr.mxu0 0.0
    %136 = vmatpush1.msra.mxu0 0.0
    %137 = vmatprep.mubr.f32.mxu0 0.0
    %138 = vmatmul.mubr.f32.gmra.mrb[0].mxu0 %v50
    %v139 = vpop.f32.mrb[0].mxu0
    %v140 = vadd.f32 %v46, %v139
    %v141 = vpop.f32.mrb[0].mxu0
    %142 = vmatprep.mubr.f32.mxu0 0.0
    %143 = vmatmul.mubr.f32.gmra.mrb[0].mxu0 %v53
    %v144 = vpop.f32.mrb[0].mxu0
    %v145 = vadd.f32 %v46, %v144
    %v146 = vpop.f32.mrb[0].mxu0
    %147 = vmatprep.mubr.f32.mxu0 0.0
    %148 = vmatmul.mubr.f32.gmra.mrb[0].mxu0 %v56
    %v149 = vpop.f32.mrb[0].mxu0
    %v150 = vadd.f32 %v46, %v149
    %v151 = vpop.f32.mrb[0].mxu0
    %152 = vmatprep.mubr.f32.mxu0 0.0
    %153 = vmatmul.mubr.f32.gmra.mrb[0].mxu0 %v59
    %v154 = vpop.f32.mrb[0].mxu0
    %v155 = vadd.f32 %v46, %v154
    %v156 = vpop.f32.mrb[0].mxu0
    %157 = vmatprep.mubr.f32.mxu0 0.0
    %158 = vmatmul.mubr.f32.gmra.mrb[0].mxu0 %v62
    %v159 = vpop.f32.mrb[0].mxu0
    %v160 = vadd.f32 %v46, %v159
    %v161 = vpop.f32.mrb[0].mxu0
    %162 = vmatprep.mubr.f32.mxu0 0.0
    %163 = vmatmul.mubr.f32.gmra.mrb[0].mxu0 %v65
    %v164 = vpop.f32.mrb[0].mxu0
    %v165 = vadd.f32 %v46, %v164
    %v166 = vpop.f32.mrb[0].mxu0
    %167 = vmatprep.mubr.f32.mxu0 0.0
    %168 = vmatmul.mubr.f32.gmra.mrb[0].mxu0 %v68
    %v169 = vpop.f32.mrb[0].mxu0
    %v170 = vadd.f32 %v46, %v169
    %v171 = vpop.f32.mrb[0].mxu0
    %172 = vmatprep.mubr.f32.mxu0 0.0
    %173 = vmatmul.mubr.f32.gmra.mrb[0].mxu0 %v71
    %v174 = vpop.f32.mrb[0].mxu0
    %v175 = vadd.f32 %v46, %v174
    %v176 = vpop.f32.mrb[0].mxu0
    %177 = vdwg.mxu0
    %178 = vst [vmem:[#allocation2] sm:$0xff] %v140
    %179 = vst [vmem:[#allocation2 + $0x8] sm:$0xff] %v145
    %180 = vst [vmem:[#allocation2 + $0x10] sm:$0xff] %v150
    %181 = vst [vmem:[#allocation2 + $0x18] sm:$0xff] %v155
    %182 = vst [vmem:[#allocation2 + $0x20] sm:$0xff] %v160
    %183 = vst [vmem:[#allocation2 + $0x28] sm:$0xff] %v165
    %184 = vst [vmem:[#allocation2 + $0x30] sm:$0xff] %v170
    %185 = vst [vmem:[#allocation2 + $0x38] sm:$0xff] %v175
    %v186 = vld [vmem:[%s2] sm:$0xff]
    %v187 = vld [vmem:[%s2 + $0x8] sm:$0xff]
    %v188 = vld [vmem:[%s2 + $0x10] sm:$0xff]
    %v189 = vld [vmem:[%s2 + $0x18] sm:$0xff]
    %v190 = vld [vmem:[#allocation3] sm:$0xff]
    %v191 = vld [vmem:[#allocation5] sm:$0xff]
    %v192 = vld [vmem:[#allocation2] sm:$0xff]
    %v194 = vsel %vm48, %v190, 0
    %196 = vmatprep.subr.mxu0 0.0
    %197 = vmatpush1.msra.mxu0 %v186
    %198 = vmatprep.subr.mxu0 0.0
    %199 = vmatpush1.msra.mxu0 %v187
    %200 = vmatprep.subr.mxu0 0.0
    %201 = vmatpush1.msra.mxu0 %v188
    %202 = vmatprep.subr.mxu0 0.0
    %203 = vmatpush1.msra.mxu0 %v189
    %204 = vmatprep.subr.mxu0 0.0
    %205 = vmatpush1.msra.mxu0 0.0
    %206 = vmatprep.subr.mxu0 0.0
    %207 = vmatpush1.msra.mxu0 0.0
    %208 = vmatprep.subr.mxu0 0.0
    %209 = vmatpush1.msra.mxu0 0.0
    %210 = vmatprep.subr.mxu0 0.0
    %211 = vmatpush1.msra.mxu0 0.0
    %212 = vmatprep.subr.mxu0 0.0
    %213 = vmatpush1.msra.mxu0 0.0
    %214 = vmatprep.subr.mxu0 0.0
    %215 = vmatpush1.msra.mxu0 0.0
    %216 = vmatprep.subr.mxu0 0.0
    %217 = vmatpush1.msra.mxu0 0.0
    %218 = vmatprep.subr.mxu0 0.0
    %219 = vmatpush1.msra.mxu0 0.0
    %220 = vmatprep.subr.mxu0 0.0
    %221 = vmatpush1.msra.mxu0 0.0
    %222 = vmatprep.subr.mxu0 0.0
    %223 = vmatpush1.msra.mxu0 0.0
    %224 = vmatprep.subr.mxu0 0.0
    %225 = vmatpush1.msra.mxu0 0.0
    %226 = vmatprep.subr.mxu0 0.0
    %227 = vmatpush1.msra.mxu0 0.0
    %228 = vmatprep.subr.mxu0 0.0
    %229 = vmatpush1.msra.mxu0 0.0
    %230 = vmatprep.subr.mxu0 0.0
    %231 = vmatpush1.msra.mxu0 0.0
    %232 = vmatprep.subr.mxu0 0.0
    %233 = vmatpush1.msra.mxu0 0.0
    %234 = vmatprep.subr.mxu0 0.0
    %235 = vmatpush1.msra.mxu0 0.0
    %236 = vmatprep.subr.mxu0 0.0
    %237 = vmatpush1.msra.mxu0 0.0
    %238 = vmatprep.subr.mxu0 0.0
    %239 = vmatpush1.msra.mxu0 0.0
    %240 = vmatprep.subr.mxu0 0.0
    %241 = vmatpush1.msra.mxu0 0.0
    %242 = vmatprep.subr.mxu0 0.0
    %243 = vmatpush1.msra.mxu0 0.0
    %244 = vmatprep.subr.mxu0 0.0
    %245 = vmatpush1.msra.mxu0 0.0
    %246 = vmatprep.subr.mxu0 0.0
    %247 = vmatpush1.msra.mxu0 0.0
    %248 = vmatprep.subr.mxu0 0.0
    %249 = vmatpush1.msra.mxu0 0.0
    %250 = vmatprep.subr.mxu0 0.0
    %251 = vmatpush1.msra.mxu0 0.0
    %252 = vmatprep.subr.mxu0 0.0
    %253 = vmatpush1.msra.mxu0 0.0
    %254 = vmatprep.subr.mxu0 0.0
    %255 = vmatpush1.msra.mxu0 0.0
    %256 = vmatprep.subr.mxu0 0.0
    %257 = vmatpush1.msra.mxu0 0.0
    %258 = vmatprep.subr.mxu0 0.0
    %259 = vmatpush1.msra.mxu0 0.0
    %260 = vmatprep.mubr.f32.mxu0 0.0
    %261 = vmatmul.mubr.f32.gmra.mrb[0].mxu0 %v194
    %v262 = vpop.f32.mrb[0].mxu0
    %v263 = vadd.f32 0.0, %v262
    %v264 = vpop.f32.mrb[0].mxu0
    %265 = vdwg.mxu0
    %v266 = vadd.f32 %v192, %v263
    %v267 = vxor.u32 %v266, 2147483648
    %v268 = vmul.f32 %v267, 1.442695
    %v269 = vpow.pop %v268
    %v270 = vadd.f32 %v269, 1.0
    %v271 = vrcp.pop %v270
    %v272 = vmul.f32 1.0, %v271
    %v273 = vtanh.pop %v266
    %275 = vrot.lane.b32.xlu0 %v191, 32
    %v276 = vpop.permute.xlu0 %275
    %v278 = vmul.f32 %v272, %v276
    %280 = vrot.lane.b32.xlu0 %v273, 32
    %v281 = vpop.permute.xlu0 %280
    %v283 = vmul.f32 %v272, %v281
    %285 = vrot.lane.b32.xlu0 %v283, 32
    %v286 = vpop.permute.xlu0 %285
    %v288 = vadd.f32 %v278, %v286
    %v289 = vtanh.pop %v288
    %291 = vrot.lane.b32.xlu0 %v289, 32
    %v292 = vpop.permute.xlu0 %291
    %v294 = vmul.f32 %v272, %v292
    %296 = vrot.lane.b32.xlu0 %v294, 64
    %v297 = vpop.permute.xlu0 %296
    %299 = vst.msk [vmem:[%s4] sm:$0xff] %vm48, %v297
    %s300 = scalar_lea.vmem [#allocation2], 8
    %v301 = vld [vmem:[%s300] sm:$0xff]
    %v302 = vsel %vm48, %v297, 0
    %304 = vmatprep.subr.mxu0 0.0
    %305 = vmatpush1.msra.mxu0 %v186
    %306 = vmatprep.subr.mxu0 0.0
    %307 = vmatpush1.msra.mxu0 %v187
    %308 = vmatprep.subr.mxu0 0.0
    %309 = vmatpush1.msra.mxu0 %v188
    %310 = vmatprep.subr.mxu0 0.0
    %311 = vmatpush1.msra.mxu0 %v189
    %312 = vmatprep.subr.mxu0 0.0
    %313 = vmatpush1.msra.mxu0 0.0
    %314 = vmatprep.subr.mxu0 0.0
    %315 = vmatpush1.msra.mxu0 0.0
    %316 = vmatprep.subr.mxu0 0.0
    %317 = vmatpush1.msra.mxu0 0.0
    %318 = vmatprep.subr.mxu0 0.0
    %319 = vmatpush1.msra.mxu0 0.0
    %320 = vmatprep.subr.mxu0 0.0
    %321 = vmatpush1.msra.mxu0 0.0
    %322 = vmatprep.subr.mxu0 0.0
    %323 = vmatpush1.msra.mxu0 0.0
    %324 = vmatprep.subr.mxu0 0.0
    %325 = vmatpush1.msra.mxu0 0.0
    %326 = vmatprep.subr.mxu0 0.0
    %327 = vmatpush1.msra.mxu0 0.0
    %328 = vmatprep.subr.mxu0 0.0
    %329 = vmatpush1.msra.mxu0 0.0
    %330 = vmatprep.subr.mxu0 0.0
    %331 = vmatpush1.msra.mxu0 0.0
    %332 = vmatprep.subr.mxu0 0.0
    %333 = vmatpush1.msra.mxu0 0.0
    %334 = vmatprep.subr.mxu0 0.0
    %335 = vmatpush1.msra.mxu0 0.0
    %336 = vmatprep.subr.mxu0 0.0
    %337 = vmatpush1.msra.mxu0 0.0
    %338 = vmatprep.subr.mxu0 0.0
    %339 = vmatpush1.msra.mxu0 0.0
    %340 = vmatprep.subr.mxu0 0.0
    %341 = vmatpush1.msra.mxu0 0.0
    %342 = vmatprep.subr.mxu0 0.0
    %343 = vmatpush1.msra.mxu0 0.0
    %344 = vmatprep.subr.mxu0 0.0
    %345 = vmatpush1.msra.mxu0 0.0
    %346 = vmatprep.subr.mxu0 0.0
    %347 = vmatpush1.msra.mxu0 0.0
    %348 = vmatprep.subr.mxu0 0.0
    %349 = vmatpush1.msra.mxu0 0.0
    %350 = vmatprep.subr.mxu0 0.0
    %351 = vmatpush1.msra.mxu0 0.0
    %352 = vmatprep.subr.mxu0 0.0
    %353 = vmatpush1.msra.mxu0 0.0
    %354 = vmatprep.subr.mxu0 0.0
    %355 = vmatpush1.msra.mxu0 0.0
    %356 = vmatprep.subr.mxu0 0.0
    %357 = vmatpush1.msra.mxu0 0.0
    %358 = vmatprep.subr.mxu0 0.0
    %359 = vmatpush1.msra.mxu0 0.0
    %360 = vmatprep.subr.mxu0 0.0
    %361 = vmatpush1.msra.mxu0 0.0
    %362 = vmatprep.subr.mxu0 0.0
    %363 = vmatpush1.msra.mxu0 0.0
    %364 = vmatprep.subr.mxu0 0.0
    %365 = vmatpush1.msra.mxu0 0.0
    %366 = vmatprep.subr.mxu0 0.0
    %367 = vmatpush1.msra.mxu0 0.0
    %368 = vmatprep.mubr.f32.mxu0 0.0
    %369 = vmatmul.mubr.f32.gmra.mrb[0].mxu0 %v302
    %v370 = vpop.f32.mrb[0].mxu0
    %v371 = vadd.f32 0.0, %v370
    %v372 = vpop.f32.mrb[0].mxu0
    %373 = vdwg.mxu0
    %v374 = vadd.f32 %v301, %v371
    %v375 = vxor.u32 %v374, 2147483648
    %v376 = vmul.f32 %v375, 1.442695
    %v377 = vpow.pop %v376
    %v378 = vadd.f32 %v377, 1.0
    %v379 = vrcp.pop %v378
    %v380 = vmul.f32 1.0, %v379
    %v381 = vtanh.pop %v374
    %v382 = vmul.f32 %v380, %v288
    %384 = vrot.lane.b32.xlu0 %v381, 32
    %v385 = vpop.permute.xlu0 %384
    %v387 = vmul.f32 %v380, %v385
    %389 = vrot.lane.b32.xlu0 %v387, 32
    %v390 = vpop.permute.xlu0 %389
    %v392 = vadd.f32 %v382, %v390
    %v393 = vtanh.pop %v392
    %395 = vrot.lane.b32.xlu0 %v393, 32
    %v396 = vpop.permute.xlu0 %395
    %v398 = vmul.f32 %v380, %v396
    %400 = vrot.lane.b32.xlu0 %v398, 64
    %v401 = vpop.permute.xlu0 %400
    %s403 = scalar_lea.vmem %s4, 8
    %404 = vst.msk [vmem:[%s403] sm:$0xff] %vm48, %v401
    %s405 = scalar_lea.vmem [#allocation2], 16
    %v406 = vld [vmem:[%s405] sm:$0xff]
    %v407 = vsel %vm48, %v401, 0
    %409 = vmatprep.subr.mxu0 0.0
    %410 = vmatpush1.msra.mxu0 %v186
    %411 = vmatprep.subr.mxu0 0.0
    %412 = vmatpush1.msra.mxu0 %v187
    %413 = vmatprep.subr.mxu0 0.0
    %414 = vmatpush1.msra.mxu0 %v188
    %415 = vmatprep.subr.mxu0 0.0
    %416 = vmatpush1.msra.mxu0 %v189
    %417 = vmatprep.subr.mxu0 0.0
    %418 = vmatpush1.msra.mxu0 0.0
    %419 = vmatprep.subr.mxu0 0.0
    %420 = vmatpush1.msra.mxu0 0.0
    %421 = vmatprep.subr.mxu0 0.0
    %422 = vmatpush1.msra.mxu0 0.0
    %423 = vmatprep.subr.mxu0 0.0
    %424 = vmatpush1.msra.mxu0 0.0
    %425 = vmatprep.subr.mxu0 0.0
    %426 = vmatpush1.msra.mxu0 0.0
    %427 = vmatprep.subr.mxu0 0.0
    %428 = vmatpush1.msra.mxu0 0.0
    %429 = vmatprep.subr.mxu0 0.0
    %430 = vmatpush1.msra.mxu0 0.0
    %431 = vmatprep.subr.mxu0 0.0
    %432 = vmatpush1.msra.mxu0 0.0
    %433 = vmatprep.subr.mxu0 0.0
    %434 = vmatpush1.msra.mxu0 0.0
    %435 = vmatprep.subr.mxu0 0.0
    %436 = vmatpush1.msra.mxu0 0.0
    %437 = vmatprep.subr.mxu0 0.0
    %438 = vmatpush1.msra.mxu0 0.0
    %439 = vmatprep.subr.mxu0 0.0
    %440 = vmatpush1.msra.mxu0 0.0
    %441 = vmatprep.subr.mxu0 0.0
    %442 = vmatpush1.msra.mxu0 0.0
    %443 = vmatprep.subr.mxu0 0.0
    %444 = vmatpush1.msra.mxu0 0.0
    %445 = vmatprep.subr.mxu0 0.0
    %446 = vmatpush1.msra.mxu0 0.0
    %447 = vmatprep.subr.mxu0 0.0
    %448 = vmatpush1.msra.mxu0 0.0
    %449 = vmatprep.subr.mxu0 0.0
    %450 = vmatpush1.msra.mxu0 0.0
    %451 = vmatprep.subr.mxu0 0.0
    %452 = vmatpush1.msra.mxu0 0.0
    %453 = vmatprep.subr.mxu0 0.0
    %454 = vmatpush1.msra.mxu0 0.0
    %455 = vmatprep.subr.mxu0 0.0
    %456 = vmatpush1.msra.mxu0 0.0
    %457 = vmatprep.subr.mxu0 0.0
    %458 = vmatpush1.msra.mxu0 0.0
    %459 = vmatprep.subr.mxu0 0.0
    %460 = vmatpush1.msra.mxu0 0.0
    %461 = vmatprep.subr.mxu0 0.0
    %462 = vmatpush1.msra.mxu0 0.0
    %463 = vmatprep.subr.mxu0 0.0
    %464 = vmatpush1.msra.mxu0 0.0
    %465 = vmatprep.subr.mxu0 0.0
    %466 = vmatpush1.msra.mxu0 0.0
    %467 = vmatprep.subr.mxu0 0.0
    %468 = vmatpush1.msra.mxu0 0.0
    %469 = vmatprep.subr.mxu0 0.0
    %470 = vmatpush1.msra.mxu0 0.0
    %471 = vmatprep.subr.mxu0 0.0
    %472 = vmatpush1.msra.mxu0 0.0
    %473 = vmatprep.mubr.f32.mxu0 0.0
    %474 = vmatmul.mubr.f32.gmra.mrb[0].mxu0 %v407
    %v475 = vpop.f32.mrb[0].mxu0
    %v476 = vadd.f32 0.0, %v475
    %v477 = vpop.f32.mrb[0].mxu0
    %478 = vdwg.mxu0
    %v479 = vadd.f32 %v406, %v476
    %v480 = vxor.u32 %v479, 2147483648
    %v481 = vmul.f32 %v480, 1.442695
    %v482 = vpow.pop %v481
    %v483 = vadd.f32 %v482, 1.0
    %v484 = vrcp.pop %v483
    %v485 = vmul.f32 1.0, %v484
    %v486 = vtanh.pop %v479
    %v487 = vmul.f32 %v485, %v392
    %489 = vrot.lane.b32.xlu0 %v486, 32
    %v490 = vpop.permute.xlu0 %489
    %v492 = vmul.f32 %v485, %v490
    %494 = vrot.lane.b32.xlu0 %v492, 32
    %v495 = vpop.permute.xlu0 %494
    %v497 = vadd.f32 %v487, %v495
    %v498 = vtanh.pop %v497
    %500 = vrot.lane.b32.xlu0 %v498, 32
    %v501 = vpop.permute.xlu0 %500
    %v503 = vmul.f32 %v485, %v501
    %505 = vrot.lane.b32.xlu0 %v503, 64
    %v506 = vpop.permute.xlu0 %505
    %s508 = scalar_lea.vmem %s4, 16
    %509 = vst.msk [vmem:[%s508] sm:$0xff] %vm48, %v506
    %s510 = scalar_lea.vmem [#allocation2], 24
    %v511 = vld [vmem:[%s510] sm:$0xff]
    %v512 = vsel %vm48, %v506, 0
    %514 = vmatprep.subr.mxu0 0.0
    %515 = vmatpush1.msra.mxu0 %v186
    %516 = vmatprep.subr.mxu0 0.0
    %517 = vmatpush1.msra.mxu0 %v187
    %518 = vmatprep.subr.mxu0 0.0
    %519 = vmatpush1.msra.mxu0 %v188
    %520 = vmatprep.subr.mxu0 0.0
    %521 = vmatpush1.msra.mxu0 %v189
    %522 = vmatprep.subr.mxu0 0.0
    %523 = vmatpush1.msra.mxu0 0.0
    %524 = vmatprep.subr.mxu0 0.0
    %525 = vmatpush1.msra.mxu0 0.0
    %526 = vmatprep.subr.mxu0 0.0
    %527 = vmatpush1.msra.mxu0 0.0
    %528 = vmatprep.subr.mxu0 0.0
    %529 = vmatpush1.msra.mxu0 0.0
    %530 = vmatprep.subr.mxu0 0.0
    %531 = vmatpush1.msra.mxu0 0.0
    %532 = vmatprep.subr.mxu0 0.0
    %533 = vmatpush1.msra.mxu0 0.0
    %534 = vmatprep.subr.mxu0 0.0
    %535 = vmatpush1.msra.mxu0 0.0
    %536 = vmatprep.subr.mxu0 0.0
    %537 = vmatpush1.msra.mxu0 0.0
    %538 = vmatprep.subr.mxu0 0.0
    %539 = vmatpush1.msra.mxu0 0.0
    %540 = vmatprep.subr.mxu0 0.0
    %541 = vmatpush1.msra.mxu0 0.0
    %542 = vmatprep.subr.mxu0 0.0
    %543 = vmatpush1.msra.mxu0 0.0
    %544 = vmatprep.subr.mxu0 0.0
    %545 = vmatpush1.msra.mxu0 0.0
    %546 = vmatprep.subr.mxu0 0.0
    %547 = vmatpush1.msra.mxu0 0.0
    %548 = vmatprep.subr.mxu0 0.0
    %549 = vmatpush1.msra.mxu0 0.0
    %550 = vmatprep.subr.mxu0 0.0
    %551 = vmatpush1.msra.mxu0 0.0
    %552 = vmatprep.subr.mxu0 0.0
    %553 = vmatpush1.msra.mxu0 0.0
    %554 = vmatprep.subr.mxu0 0.0
    %555 = vmatpush1.msra.mxu0 0.0
    %556 = vmatprep.subr.mxu0 0.0
    %557 = vmatpush1.msra.mxu0 0.0
    %558 = vmatprep.subr.mxu0 0.0
    %559 = vmatpush1.msra.mxu0 0.0
    %560 = vmatprep.subr.mxu0 0.0
    %561 = vmatpush1.msra.mxu0 0.0
    %562 = vmatprep.subr.mxu0 0.0
    %563 = vmatpush1.msra.mxu0 0.0
    %564 = vmatprep.subr.mxu0 0.0
    %565 = vmatpush1.msra.mxu0 0.0
    %566 = vmatprep.subr.mxu0 0.0
    %567 = vmatpush1.msra.mxu0 0.0
    %568 = vmatprep.subr.mxu0 0.0
    %569 = vmatpush1.msra.mxu0 0.0
    %570 = vmatprep.subr.mxu0 0.0
    %571 = vmatpush1.msra.mxu0 0.0
    %572 = vmatprep.subr.mxu0 0.0
    %573 = vmatpush1.msra.mxu0 0.0
    %574 = vmatprep.subr.mxu0 0.0
    %575 = vmatpush1.msra.mxu0 0.0
    %576 = vmatprep.subr.mxu0 0.0
    %577 = vmatpush1.msra.mxu0 0.0
    %578 = vmatprep.mubr.f32.mxu0 0.0
    %579 = vmatmul.mubr.f32.gmra.mrb[0].mxu0 %v512
    %v580 = vpop.f32.mrb[0].mxu0
    %v581 = vadd.f32 0.0, %v580
    %v582 = vpop.f32.mrb[0].mxu0
    %583 = vdwg.mxu0
    %v584 = vadd.f32 %v511, %v581
    %v585 = vxor.u32 %v584, 2147483648
    %v586 = vmul.f32 %v585, 1.442695
    %v587 = vpow.pop %v586
    %v588 = vadd.f32 %v587, 1.0
    %v589 = vrcp.pop %v588
    %v590 = vmul.f32 1.0, %v589
    %v591 = vtanh.pop %v584
    %v592 = vmul.f32 %v590, %v497
    %594 = vrot.lane.b32.xlu0 %v591, 32
    %v595 = vpop.permute.xlu0 %594
    %v597 = vmul.f32 %v590, %v595
    %599 = vrot.lane.b32.xlu0 %v597, 32
    %v600 = vpop.permute.xlu0 %599
    %v602 = vadd.f32 %v592, %v600
    %v603 = vtanh.pop %v602
    %605 = vrot.lane.b32.xlu0 %v603, 32
    %v606 = vpop.permute.xlu0 %605
    %v608 = vmul.f32 %v590, %v606
    %610 = vrot.lane.b32.xlu0 %v608, 64
    %v611 = vpop.permute.xlu0 %610
    %s613 = scalar_lea.vmem %s4, 24
    %614 = vst.msk [vmem:[%s613] sm:$0xff] %vm48, %v611
    %s615 = scalar_lea.vmem [#allocation2], 32
    %v616 = vld [vmem:[%s615] sm:$0xff]
    %v617 = vsel %vm48, %v611, 0
    %619 = vmatprep.subr.mxu0 0.0
    %620 = vmatpush1.msra.mxu0 %v186
    %621 = vmatprep.subr.mxu0 0.0
    %622 = vmatpush1.msra.mxu0 %v187
    %623 = vmatprep.subr.mxu0 0.0
    %624 = vmatpush1.msra.mxu0 %v188
    %625 = vmatprep.subr.mxu0 0.0
    %626 = vmatpush1.msra.mxu0 %v189
    %627 = vmatprep.subr.mxu0 0.0
    %628 = vmatpush1.msra.mxu0 0.0
    %629 = vmatprep.subr.mxu0 0.0
    %630 = vmatpush1.msra.mxu0 0.0
    %631 = vmatprep.subr.mxu0 0.0
    %632 = vmatpush1.msra.mxu0 0.0
    %633 = vmatprep.subr.mxu0 0.0
    %634 = vmatpush1.msra.mxu0 0.0
    %635 = vmatprep.subr.mxu0 0.0
    %636 = vmatpush1.msra.mxu0 0.0
    %637 = vmatprep.subr.mxu0 0.0
    %638 = vmatpush1.msra.mxu0 0.0
    %639 = vmatprep.subr.mxu0 0.0
    %640 = vmatpush1.msra.mxu0 0.0
    %641 = vmatprep.subr.mxu0 0.0
    %642 = vmatpush1.msra.mxu0 0.0
    %643 = vmatprep.subr.mxu0 0.0
    %644 = vmatpush1.msra.mxu0 0.0
    %645 = vmatprep.subr.mxu0 0.0
    %646 = vmatpush1.msra.mxu0 0.0
    %647 = vmatprep.subr.mxu0 0.0
    %648 = vmatpush1.msra.mxu0 0.0
    %649 = vmatprep.subr.mxu0 0.0
    %650 = vmatpush1.msra.mxu0 0.0
    %651 = vmatprep.subr.mxu0 0.0
    %652 = vmatpush1.msra.mxu0 0.0
    %653 = vmatprep.subr.mxu0 0.0
    %654 = vmatpush1.msra.mxu0 0.0
    %655 = vmatprep.subr.mxu0 0.0
    %656 = vmatpush1.msra.mxu0 0.0
    %657 = vmatprep.subr.mxu0 0.0
    %658 = vmatpush1.msra.mxu0 0.0
    %659 = vmatprep.subr.mxu0 0.0
    %660 = vmatpush1.msra.mxu0 0.0
    %661 = vmatprep.subr.mxu0 0.0
    %662 = vmatpush1.msra.mxu0 0.0
    %663 = vmatprep.subr.mxu0 0.0
    %664 = vmatpush1.msra.mxu0 0.0
    %665 = vmatprep.subr.mxu0 0.0
    %666 = vmatpush1.msra.mxu0 0.0
    %667 = vmatprep.subr.mxu0 0.0
    %668 = vmatpush1.msra.mxu0 0.0
    %669 = vmatprep.subr.mxu0 0.0
    %670 = vmatpush1.msra.mxu0 0.0
    %671 = vmatprep.subr.mxu0 0.0
    %672 = vmatpush1.msra.mxu0 0.0
    %673 = vmatprep.subr.mxu0 0.0
    %674 = vmatpush1.msra.mxu0 0.0
    %675 = vmatprep.subr.mxu0 0.0
    %676 = vmatpush1.msra.mxu0 0.0
    %677 = vmatprep.subr.mxu0 0.0
    %678 = vmatpush1.msra.mxu0 0.0
    %679 = vmatprep.subr.mxu0 0.0
    %680 = vmatpush1.msra.mxu0 0.0
    %681 = vmatprep.subr.mxu0 0.0
    %682 = vmatpush1.msra.mxu0 0.0
    %683 = vmatprep.mubr.f32.mxu0 0.0
    %684 = vmatmul.mubr.f32.gmra.mrb[0].mxu0 %v617
    %v685 = vpop.f32.mrb[0].mxu0
    %v686 = vadd.f32 0.0, %v685
    %v687 = vpop.f32.mrb[0].mxu0
    %688 = vdwg.mxu0
    %v689 = vadd.f32 %v616, %v686
    %v690 = vxor.u32 %v689, 2147483648
    %v691 = vmul.f32 %v690, 1.442695
    %v692 = vpow.pop %v691
    %v693 = vadd.f32 %v692, 1.0
    %v694 = vrcp.pop %v693
    %v695 = vmul.f32 1.0, %v694
    %v696 = vtanh.pop %v689
    %v697 = vmul.f32 %v695, %v602
    %699 = vrot.lane.b32.xlu0 %v696, 32
    %v700 = vpop.permute.xlu0 %699
    %v702 = vmul.f32 %v695, %v700
    %704 = vrot.lane.b32.xlu0 %v702, 32
    %v705 = vpop.permute.xlu0 %704
    %v707 = vadd.f32 %v697, %v705
    %v708 = vtanh.pop %v707
    %710 = vrot.lane.b32.xlu0 %v708, 32
    %v711 = vpop.permute.xlu0 %710
    %v713 = vmul.f32 %v695, %v711
    %715 = vrot.lane.b32.xlu0 %v713, 64
    %v716 = vpop.permute.xlu0 %715
    %s718 = scalar_lea.vmem %s4, 32
    %719 = vst.msk [vmem:[%s718] sm:$0xff] %vm48, %v716
    %s720 = scalar_lea.vmem [#allocation2], 40
    %v721 = vld [vmem:[%s720] sm:$0xff]
    %v722 = vsel %vm48, %v716, 0
    %724 = vmatprep.subr.mxu0 0.0
    %725 = vmatpush1.msra.mxu0 %v186
    %726 = vmatprep.subr.mxu0 0.0
    %727 = vmatpush1.msra.mxu0 %v187
    %728 = vmatprep.subr.mxu0 0.0
    %729 = vmatpush1.msra.mxu0 %v188
    %730 = vmatprep.subr.mxu0 0.0
    %731 = vmatpush1.msra.mxu0 %v189
    %732 = vmatprep.subr.mxu0 0.0
    %733 = vmatpush1.msra.mxu0 0.0
    %734 = vmatprep.subr.mxu0 0.0
    %735 = vmatpush1.msra.mxu0 0.0
    %736 = vmatprep.subr.mxu0 0.0
    %737 = vmatpush1.msra.mxu0 0.0
    %738 = vmatprep.subr.mxu0 0.0
    %739 = vmatpush1.msra.mxu0 0.0
    %740 = vmatprep.subr.mxu0 0.0
    %741 = vmatpush1.msra.mxu0 0.0
    %742 = vmatprep.subr.mxu0 0.0
    %743 = vmatpush1.msra.mxu0 0.0
    %744 = vmatprep.subr.mxu0 0.0
    %745 = vmatpush1.msra.mxu0 0.0
    %746 = vmatprep.subr.mxu0 0.0
    %747 = vmatpush1.msra.mxu0 0.0
    %748 = vmatprep.subr.mxu0 0.0
    %749 = vmatpush1.msra.mxu0 0.0
    %750 = vmatprep.subr.mxu0 0.0
    %751 = vmatpush1.msra.mxu0 0.0
    %752 = vmatprep.subr.mxu0 0.0
    %753 = vmatpush1.msra.mxu0 0.0
    %754 = vmatprep.subr.mxu0 0.0
    %755 = vmatpush1.msra.mxu0 0.0
    %756 = vmatprep.subr.mxu0 0.0
    %757 = vmatpush1.msra.mxu0 0.0
    %758 = vmatprep.subr.mxu0 0.0
    %759 = vmatpush1.msra.mxu0 0.0
    %760 = vmatprep.subr.mxu0 0.0
    %761 = vmatpush1.msra.mxu0 0.0
    %762 = vmatprep.subr.mxu0 0.0
    %763 = vmatpush1.msra.mxu0 0.0
    %764 = vmatprep.subr.mxu0 0.0
    %765 = vmatpush1.msra.mxu0 0.0
    %766 = vmatprep.subr.mxu0 0.0
    %767 = vmatpush1.msra.mxu0 0.0
    %768 = vmatprep.subr.mxu0 0.0
    %769 = vmatpush1.msra.mxu0 0.0
    %770 = vmatprep.subr.mxu0 0.0
    %771 = vmatpush1.msra.mxu0 0.0
    %772 = vmatprep.subr.mxu0 0.0
    %773 = vmatpush1.msra.mxu0 0.0
    %774 = vmatprep.subr.mxu0 0.0
    %775 = vmatpush1.msra.mxu0 0.0
    %776 = vmatprep.subr.mxu0 0.0
    %777 = vmatpush1.msra.mxu0 0.0
    %778 = vmatprep.subr.mxu0 0.0
    %779 = vmatpush1.msra.mxu0 0.0
    %780 = vmatprep.subr.mxu0 0.0
    %781 = vmatpush1.msra.mxu0 0.0
    %782 = vmatprep.subr.mxu0 0.0
    %783 = vmatpush1.msra.mxu0 0.0
    %784 = vmatprep.subr.mxu0 0.0
    %785 = vmatpush1.msra.mxu0 0.0
    %786 = vmatprep.subr.mxu0 0.0
    %787 = vmatpush1.msra.mxu0 0.0
    %788 = vmatprep.mubr.f32.mxu0 0.0
    %789 = vmatmul.mubr.f32.gmra.mrb[0].mxu0 %v722
    %v790 = vpop.f32.mrb[0].mxu0
    %v791 = vadd.f32 0.0, %v790
    %v792 = vpop.f32.mrb[0].mxu0
    %793 = vdwg.mxu0
    %v794 = vadd.f32 %v721, %v791
    %v795 = vxor.u32 %v794, 2147483648
    %v796 = vmul.f32 %v795, 1.442695
    %v797 = vpow.pop %v796
    %v798 = vadd.f32 %v797, 1.0
    %v799 = vrcp.pop %v798
    %v800 = vmul.f32 1.0, %v799
    %v801 = vtanh.pop %v794
    %v802 = vmul.f32 %v800, %v707
    %804 = vrot.lane.b32.xlu0 %v801, 32
    %v805 = vpop.permute.xlu0 %804
    %v807 = vmul.f32 %v800, %v805
    %809 = vrot.lane.b32.xlu0 %v807, 32
    %v810 = vpop.permute.xlu0 %809
    %v812 = vadd.f32 %v802, %v810
    %v813 = vtanh.pop %v812
    %815 = vrot.lane.b32.xlu0 %v813, 32
    %v816 = vpop.permute.xlu0 %815
    %v818 = vmul.f32 %v800, %v816
    %820 = vrot.lane.b32.xlu0 %v818, 64
    %v821 = vpop.permute.xlu0 %820
    %s823 = scalar_lea.vmem %s4, 40
    %824 = vst.msk [vmem:[%s823] sm:$0xff] %vm48, %v821
    %s825 = scalar_lea.vmem [#allocation2], 48
    %v826 = vld [vmem:[%s825] sm:$0xff]
    %v827 = vsel %vm48, %v821, 0
    %829 = vmatprep.subr.mxu0 0.0
    %830 = vmatpush1.msra.mxu0 %v186
    %831 = vmatprep.subr.mxu0 0.0
    %832 = vmatpush1.msra.mxu0 %v187
    %833 = vmatprep.subr.mxu0 0.0
    %834 = vmatpush1.msra.mxu0 %v188
    %835 = vmatprep.subr.mxu0 0.0
    %836 = vmatpush1.msra.mxu0 %v189
    %837 = vmatprep.subr.mxu0 0.0
    %838 = vmatpush1.msra.mxu0 0.0
    %839 = vmatprep.subr.mxu0 0.0
    %840 = vmatpush1.msra.mxu0 0.0
    %841 = vmatprep.subr.mxu0 0.0
    %842 = vmatpush1.msra.mxu0 0.0
    %843 = vmatprep.subr.mxu0 0.0
    %844 = vmatpush1.msra.mxu0 0.0
    %845 = vmatprep.subr.mxu0 0.0
    %846 = vmatpush1.msra.mxu0 0.0
    %847 = vmatprep.subr.mxu0 0.0
    %848 = vmatpush1.msra.mxu0 0.0
    %849 = vmatprep.subr.mxu0 0.0
    %850 = vmatpush1.msra.mxu0 0.0
    %851 = vmatprep.subr.mxu0 0.0
    %852 = vmatpush1.msra.mxu0 0.0
    %853 = vmatprep.subr.mxu0 0.0
    %854 = vmatpush1.msra.mxu0 0.0
    %855 = vmatprep.subr.mxu0 0.0
    %856 = vmatpush1.msra.mxu0 0.0
    %857 = vmatprep.subr.mxu0 0.0
    %858 = vmatpush1.msra.mxu0 0.0
    %859 = vmatprep.subr.mxu0 0.0
    %860 = vmatpush1.msra.mxu0 0.0
    %861 = vmatprep.subr.mxu0 0.0
    %862 = vmatpush1.msra.mxu0 0.0
    %863 = vmatprep.subr.mxu0 0.0
    %864 = vmatpush1.msra.mxu0 0.0
    %865 = vmatprep.subr.mxu0 0.0
    %866 = vmatpush1.msra.mxu0 0.0
    %867 = vmatprep.subr.mxu0 0.0
    %868 = vmatpush1.msra.mxu0 0.0
    %869 = vmatprep.subr.mxu0 0.0
    %870 = vmatpush1.msra.mxu0 0.0
    %871 = vmatprep.subr.mxu0 0.0
    %872 = vmatpush1.msra.mxu0 0.0
    %873 = vmatprep.subr.mxu0 0.0
    %874 = vmatpush1.msra.mxu0 0.0
    %875 = vmatprep.subr.mxu0 0.0
    %876 = vmatpush1.msra.mxu0 0.0
    %877 = vmatprep.subr.mxu0 0.0
    %878 = vmatpush1.msra.mxu0 0.0
    %879 = vmatprep.subr.mxu0 0.0
    %880 = vmatpush1.msra.mxu0 0.0
    %881 = vmatprep.subr.mxu0 0.0
    %882 = vmatpush1.msra.mxu0 0.0
    %883 = vmatprep.subr.mxu0 0.0
    %884 = vmatpush1.msra.mxu0 0.0
    %885 = vmatprep.subr.mxu0 0.0
    %886 = vmatpush1.msra.mxu0 0.0
    %887 = vmatprep.subr.mxu0 0.0
    %888 = vmatpush1.msra.mxu0 0.0
    %889 = vmatprep.subr.mxu0 0.0
    %890 = vmatpush1.msra.mxu0 0.0
    %891 = vmatprep.subr.mxu0 0.0
    %892 = vmatpush1.msra.mxu0 0.0
    %893 = vmatprep.mubr.f32.mxu0 0.0
    %894 = vmatmul.mubr.f32.gmra.mrb[0].mxu0 %v827
    %v895 = vpop.f32.mrb[0].mxu0
    %v896 = vadd.f32 0.0, %v895
    %v897 = vpop.f32.mrb[0].mxu0
    %898 = vdwg.mxu0
    %v899 = vadd.f32 %v826, %v896
    %v900 = vxor.u32 %v899, 2147483648
    %v901 = vmul.f32 %v900, 1.442695
    %v902 = vpow.pop %v901
    %v903 = vadd.f32 %v902, 1.0
    %v904 = vrcp.pop %v903
    %v905 = vmul.f32 1.0, %v904
    %v906 = vtanh.pop %v899
    %v907 = vmul.f32 %v905, %v812
    %909 = vrot.lane.b32.xlu0 %v906, 32
    %v910 = vpop.permute.xlu0 %909
    %v912 = vmul.f32 %v905, %v910
    %914 = vrot.lane.b32.xlu0 %v912, 32
    %v915 = vpop.permute.xlu0 %914
    %v917 = vadd.f32 %v907, %v915
    %v918 = vtanh.pop %v917
    %920 = vrot.lane.b32.xlu0 %v918, 32
    %v921 = vpop.permute.xlu0 %920
    %v923 = vmul.f32 %v905, %v921
    %925 = vrot.lane.b32.xlu0 %v923, 64
    %v926 = vpop.permute.xlu0 %925
    %s928 = scalar_lea.vmem %s4, 48
    %929 = vst.msk [vmem:[%s928] sm:$0xff] %vm48, %v926
    %s930 = scalar_lea.vmem [#allocation2], 56
    %v931 = vld [vmem:[%s930] sm:$0xff]
    %v932 = vsel %vm48, %v926, 0
    %934 = vmatprep.subr.mxu0 0.0
    %935 = vmatpush1.msra.mxu0 %v186
    %936 = vmatprep.subr.mxu0 0.0
    %937 = vmatpush1.msra.mxu0 %v187
    %938 = vmatprep.subr.mxu0 0.0
    %939 = vmatpush1.msra.mxu0 %v188
    %940 = vmatprep.subr.mxu0 0.0
    %941 = vmatpush1.msra.mxu0 %v189
    %942 = vmatprep.subr.mxu0 0.0
    %943 = vmatpush1.msra.mxu0 0.0
    %944 = vmatprep.subr.mxu0 0.0
    %945 = vmatpush1.msra.mxu0 0.0
    %946 = vmatprep.subr.mxu0 0.0
    %947 = vmatpush1.msra.mxu0 0.0
    %948 = vmatprep.subr.mxu0 0.0
    %949 = vmatpush1.msra.mxu0 0.0
    %950 = vmatprep.subr.mxu0 0.0
    %951 = vmatpush1.msra.mxu0 0.0
    %952 = vmatprep.subr.mxu0 0.0
    %953 = vmatpush1.msra.mxu0 0.0
    %954 = vmatprep.subr.mxu0 0.0
    %955 = vmatpush1.msra.mxu0 0.0
    %956 = vmatprep.subr.mxu0 0.0
    %957 = vmatpush1.msra.mxu0 0.0
    %958 = vmatprep.subr.mxu0 0.0
    %959 = vmatpush1.msra.mxu0 0.0
    %960 = vmatprep.subr.mxu0 0.0
    %961 = vmatpush1.msra.mxu0 0.0
    %962 = vmatprep.subr.mxu0 0.0
    %963 = vmatpush1.msra.mxu0 0.0
    %964 = vmatprep.subr.mxu0 0.0
    %965 = vmatpush1.msra.mxu0 0.0
    %966 = vmatprep.subr.mxu0 0.0
    %967 = vmatpush1.msra.mxu0 0.0
    %968 = vmatprep.subr.mxu0 0.0
    %969 = vmatpush1.msra.mxu0 0.0
    %970 = vmatprep.subr.mxu0 0.0
    %971 = vmatpush1.msra.mxu0 0.0
    %972 = vmatprep.subr.mxu0 0.0
    %973 = vmatpush1.msra.mxu0 0.0
    %974 = vmatprep.subr.mxu0 0.0
    %975 = vmatpush1.msra.mxu0 0.0
    %976 = vmatprep.subr.mxu0 0.0
    %977 = vmatpush1.msra.mxu0 0.0
    %978 = vmatprep.subr.mxu0 0.0
    %979 = vmatpush1.msra.mxu0 0.0
    %980 = vmatprep.subr.mxu0 0.0
    %981 = vmatpush1.msra.mxu0 0.0
    %982 = vmatprep.subr.mxu0 0.0
    %983 = vmatpush1.msra.mxu0 0.0
    %984 = vmatprep.subr.mxu0 0.0
    %985 = vmatpush1.msra.mxu0 0.0
    %986 = vmatprep.subr.mxu0 0.0
    %987 = vmatpush1.msra.mxu0 0.0
    %988 = vmatprep.subr.mxu0 0.0
    %989 = vmatpush1.msra.mxu0 0.0
    %990 = vmatprep.subr.mxu0 0.0
    %991 = vmatpush1.msra.mxu0 0.0
    %992 = vmatprep.subr.mxu0 0.0
    %993 = vmatpush1.msra.mxu0 0.0
    %994 = vmatprep.subr.mxu0 0.0
    %995 = vmatpush1.msra.mxu0 0.0
    %996 = vmatprep.subr.mxu0 0.0
    %997 = vmatpush1.msra.mxu0 0.0
    %998 = vmatprep.mubr.f32.mxu0 0.0
    %999 = vmatmul.mubr.f32.gmra.mrb[0].mxu0 %v932
    %v1000 = vpop.f32.mrb[0].mxu0
    %v1001 = vadd.f32 0.0, %v1000
    %v1002 = vpop.f32.mrb[0].mxu0
    %1003 = vdwg.mxu0
    %v1004 = vadd.f32 %v931, %v1001
    %v1005 = vxor.u32 %v1004, 2147483648
    %v1006 = vmul.f32 %v1005, 1.442695
    %v1007 = vpow.pop %v1006
    %v1008 = vadd.f32 %v1007, 1.0
    %v1009 = vrcp.pop %v1008
    %v1010 = vmul.f32 1.0, %v1009
    %v1011 = vtanh.pop %v1004
    %v1012 = vmul.f32 %v1010, %v917
    %1014 = vrot.lane.b32.xlu0 %v1011, 32
    %v1015 = vpop.permute.xlu0 %1014
    %v1017 = vmul.f32 %v1010, %v1015
    %1019 = vrot.lane.b32.xlu0 %v1017, 32
    %v1020 = vpop.permute.xlu0 %1019
    %v1022 = vadd.f32 %v1012, %v1020
    %v1023 = vtanh.pop %v1022
    %1025 = vrot.lane.b32.xlu0 %v1023, 32
    %v1026 = vpop.permute.xlu0 %1025
    %v1028 = vmul.f32 %v1010, %v1026
    %1030 = vrot.lane.b32.xlu0 %v1028, 64
    %v1031 = vpop.permute.xlu0 %1030
    %s1033 = scalar_lea.vmem %s4, 56
    %1034 = vst.msk [vmem:[%s1033] sm:$0xff] %vm48, %v1031
    %1035 = vst.msk [vmem:[#allocation3] sm:$0xff] %vm48, %v1031
    %1037 = vrot.lane.b32.xlu0 %v1022, 96
    %v1038 = vpop.permute.xlu0 %1037
    %1040 = vst.msk [vmem:[#allocation5] sm:$0xff] %vm48, %v1038
    // Predicated region
    $region22: #{tpu_custom_call.1} parent=1 // pred_check
      _
    $region23: #{tpu_custom_call.1} parent=1 // pred_check_branch
      %1042 = sbr.rel (0) target = $region25
    $region24: #{tpu_custom_call.1} parent=1 // pred_region
      _
    $region25: #{tpu_custom_call.1} parent=1 // pred_fallthru
      _
    // Predicated region
    $region26: #{tpu_custom_call.1} parent=1 // pred_check
      _
    $region27: #{tpu_custom_call.1} parent=1 // pred_check_branch
      %1044 = sbr.rel (0) target = $region29
    $region28: #{tpu_custom_call.1} parent=1 // pred_region
      %s1046 = ssub.s32 128, 128
      %1047 = vsyncadd [#allocation4], %s1046
      %s1049 = sshll.u32 [#allocation3], 4
      %s1050 = int_to_ptr.vmem [resolvable:$true] %s1049
      %1052 = dma.vmem_to_hbm [thread:$0]  %s1050, 128, %s5, [#allocation4]
    $region29: #{tpu_custom_call.1} parent=1 // pred_fallthru
      _
    // Predicated region
    $region30: #{tpu_custom_call.1} parent=1 // pred_check
      _
    $region31: #{tpu_custom_call.1} parent=1 // pred_check_branch
      %1054 = sbr.rel (0) target = $region33
    $region32: #{tpu_custom_call.1} parent=1 // pred_region
      %s1056 = ssub.s32 128, 128
      %1057 = vsyncadd [#allocation6], %s1056
      %s1059 = sshll.u32 [#allocation5], 4
      %s1060 = int_to_ptr.vmem [resolvable:$true] %s1059
      %1062 = dma.vmem_to_hbm [thread:$0]  %s1060, 128, %s6, [#allocation6]
    $region33: #{tpu_custom_call.1} parent=1 // pred_fallthru
      _
    // Predicated region
    $region34: #{tpu_custom_call.1} parent=1 // pred_check
      _
    $region35: #{tpu_custom_call.1} parent=1 // pred_check_branch
      %1064 = sbr.rel (0) target = $region37
    $region36: #{tpu_custom_call.1} parent=1 // pred_region
      _
    $region37: #{tpu_custom_call.1} parent=1 // pred_fallthru
      _
    // Predicated region
    $region38: #{tpu_custom_call.1} parent=1 // pred_check
      _
    $region39: #{tpu_custom_call.1} parent=1 // pred_check_branch
      %1066 = sbr.rel (0) target = $region41
    $region40: #{tpu_custom_call.1} parent=1 // pred_region
      %1067 = dma.done [#allocation4], 128
    $region41: #{tpu_custom_call.1} parent=1 // pred_fallthru
      _
    // Predicated region
    $region42: #{tpu_custom_call.1} parent=1 // pred_check
      _
    $region43: #{tpu_custom_call.1} parent=1 // pred_check_branch
      %1069 = sbr.rel (0) target = $region45
    $region44: #{tpu_custom_call.1} parent=1 // pred_region
      %1070 = dma.done [#allocation6], 128
    $region45: #{tpu_custom_call.1} parent=1 // pred_fallthru
      _
    %1071 = vsyncpa [#allocation4], 1
    %1072 = vsyncpa [#allocation6], 1

</llo_original>
